<compile_context>
chip_gen: v5e
topology: v5e:2x2
jax: 0.10.0
libtpu: 0.0.40
codegen_flags: <defaults>
</compile_context>

<pallas_src>
import jax
import jax.numpy as jnp
from jax import lax
from jax.experimental import pallas as pl
from jax.experimental.pallas import tpu as pltpu


# ----------------------------- Embedding (gather, outside Pallas) -----------------------------
def embedding_lookup(ids_bt, table):
    # Gather is DMA-only; emit time-major bf16 so the conv/LSTM never need a transpose.
    V = table.shape[0]
    ids_tm = jnp.transpose(jnp.clip(ids_bt.astype(jnp.int32), 0, V - 1))   # (T, Bp)
    return jnp.take(table, ids_tm, axis=0).astype(jnp.bfloat16)            # (T, Bp, E) bf16


# --------------------- Fused 3x [Conv1d(k=5, same) + BN(eval) + ReLU] ---------------------
def conv_stack_kernel(x_ref, w_ref, scale_ref, shift_ref, out_ref, act_scr):
    T, Bt, E = x_ref.shape
    L, KE, _ = w_ref.shape
    K = KE // E
    pad = (K - 1) // 2

    # Zero-halo activation scratch (T + 2*pad, Bt, E) bf16; interior rewritten every layer.
    zhalo = jnp.zeros((pad, Bt, E), jnp.bfloat16)
    act_scr[pl.ds(0, pad)] = zhalo
    act_scr[pl.ds(T + pad, pad)] = zhalo
    act_scr[pl.ds(pad, T)] = x_ref[...]

    for layer in range(L):                                 # static unroll over the 3 conv blocks
        apad = act_scr[...]                                # (T+2p, Bt, E) bf16
        # Block-level im2col: K time-shifted slabs concatenated on the lane axis, all bf16.
        cols = jnp.concatenate([apad[k:k + T] for k in range(K)], axis=-1)    # (T, Bt, K*E)
        y = jnp.dot(cols.reshape(T * Bt, KE), w_ref[layer],                   # single long-K matmul
                    preferred_element_type=jnp.float32)                       # (T*Bt, E) f32
        y = jnp.maximum(y * scale_ref[layer] + shift_ref[layer], 0.0)         # bias+BN(eval)+ReLU
        y_bf = y.astype(jnp.bfloat16).reshape(T, Bt, E)                       # Dropout = identity
        if layer + 1 < L:
            act_scr[pl.ds(pad, T)] = y_bf
        else:
            out_ref[...] = y_bf


def conv_stack(x_tbe, w_stack, scale_stack, shift_stack, block_batch=8):
    # x_tbe: (T, Bp, E) bf16; w_stack: (L, K*E, E) bf16; scale/shift: (L, 1, E) f32
    T, Bp, E = x_tbe.shape
    L, KE, _ = w_stack.shape
    K = KE // E
    Bt = min(block_batch, Bp)
    assert E % 128 == 0 and T % 8 == 0 and Bt % 8 == 0 and Bp % Bt == 0

    est = (4 * T * Bt * E * 2                       # in + out blocks, double-buffered, bf16
           + L * KE * E * 2 + 2 * L * E * 4         # weights + scale/shift
           + (T + K - 1) * Bt * E * 2               # halo scratch
           + T * Bt * KE * 2 + 2 * T * Bt * E * 4)  # im2col + f32 temporaries
    vmem_limit = int(min(100 * 2**20, max(32 * 2**20, 2 * est)))

    return pl.pallas_call(
        conv_stack_kernel,
        out_shape=jax.ShapeDtypeStruct((T, Bp, E), jnp.bfloat16),
        grid=(Bp // Bt,),
        in_specs=[
            pl.BlockSpec((T, Bt, E), lambda i: (0, i, 0)),
            pl.BlockSpec((L, KE, E), lambda i: (0, 0, 0)),
            pl.BlockSpec((L, 1, E), lambda i: (0, 0, 0)),
            pl.BlockSpec((L, 1, E), lambda i: (0, 0, 0)),
        ],
        out_specs=pl.BlockSpec((T, Bt, E), lambda i: (0, i, 0)),
        scratch_shapes=[pltpu.VMEM((T + K - 1, Bt, E), jnp.bfloat16)],
        compiler_params=pltpu.CompilerParams(
            dimension_semantics=("parallel",),
            vmem_limit_bytes=vmem_limit),
    )(x_tbe, w_stack, scale_stack, shift_stack)


# ------------------------- BiLSTM, batch-blocked grid, packed-sequence masking -------------------------
def bilstm_kernel(len_ref, x_ref, wih_ref, whh_f_ref, whh_b_ref, b_ref, out_ref, xg_scr):
    T, Bb, E = x_ref.shape
    H = whh_f_ref.shape[0]
    G = 4 * H

    # Fused bf16 input projection for BOTH directions: one (T*Bb, E) @ (E, 8H) matmul (f32 acc).
    xg = jnp.dot(x_ref[...].reshape(T * Bb, E), wih_ref[...],
                 preferred_element_type=jnp.float32) + b_ref[...]
    xg_scr[...] = xg.astype(jnp.bfloat16).reshape(T, Bb, 2 * G)   # bf16 halves the gate slab

    lens = len_ref[...]                                   # (Bb, 1) int32, loop-invariant
    whh_f = whh_f_ref[...]                                 # (H, 4H) bf16, stays resident
    whh_b = whh_b_ref[...]

    def sigmoid(z):                                        # 1 EUP tanh instead of exp + recip
        return 0.5 * jnp.tanh(0.5 * z) + 0.5

    def cell(gates, c):                                    # PyTorch gate order: i, f, g, o
        i = sigmoid(gates[:, 0:H])
        f = sigmoid(gates[:, H:2 * H])
        g = jnp.tanh(gates[:, 2 * H:3 * H])
        o = sigmoid(gates[:, 3 * H:4 * H])
        c_new = f * c + i * g
        return o * jnp.tanh(c_new), c_new

    def step(s, carry):
        hf, cf, hb, cb = carry
        tf = s
        tb = T - 1 - s
        xg_f = xg_scr[tf]                                  # (Bb, 8H) aligned bf16 slab
        xg_b = xg_scr[tb]
        gates_f = xg_f[:, :G] + jnp.dot(hf.astype(jnp.bfloat16), whh_f,
                                        preferred_element_type=jnp.float32)
        gates_b = xg_b[:, G:] + jnp.dot(hb.astype(jnp.bfloat16), whh_b,
                                        preferred_element_type=jnp.float32)
        hf_new, cf_new = cell(gates_f, cf)
        hb_new, cb_new = cell(gates_b, cb)
        valid_f = tf < lens                                # (Bb, 1)
        valid_b = tb < lens
        # Write the two direction halves directly (no concatenate); lane-aligned (H = k*128).
        out_ref[pl.ds(tf, 1), :, :H] = jnp.where(valid_f, hf_new, 0.0)[None]
        out_ref[pl.ds(tb, 1), :, H:] = jnp.where(valid_b, hb_new, 0.0)[None]
        # Backward state only advances on valid steps => recurrence starts at t = L-1.
        hb = jnp.where(valid_b, hb_new, hb)
        cb = jnp.where(valid_b, cb_new, cb)
        return (hf_new, cf_new, hb, cb)

    zero = jnp.zeros((Bb, H), jnp.float32)
    # unroll=2: gives the scheduler a window to interleave the independent fwd/bwd chains.
    lax.fori_loop(0, T, step, (zero, zero, zero, zero), unroll=2)


def bilstm(x_tbe, lengths, wih_cat, whh_f, whh_b, b_cat, block_batch=8):
    # x_tbe: (T, Bp, E) bf16; wih_cat: (E, 8H) bf16; whh_*: (H, 4H) bf16; b_cat: (1, 8H) f32
    T, Bp, E = x_tbe.shape
    H = whh_f.shape[0]
    Bb = min(block_batch, Bp)
    assert E % 128 == 0 and H % 128 == 0 and T % 8 == 0 and Bb % 8 == 0 and Bp % Bb == 0
    lens = lengths.astype(jnp.int32).reshape(Bp, 1)

    est = (2 * T * Bb * E * 2                         # x block, double-buffered
           + 2 * T * Bb * 2 * H * 4                   # out block, double-buffered
           + T * Bb * 8 * H * (2 + 4)                 # bf16 gate scratch + f32 projection temp
           + (E * 8 * H + 2 * H * 4 * H) * 2          # weights
           + 8 * H * 4 + Bb * 4)
    vmem_limit = int(min(100 * 2**20, max(32 * 2**20, 2 * est)))

    return pl.pallas_call(
        bilstm_kernel,
        out_shape=jax.ShapeDtypeStruct((T, Bp, 2 * H), jnp.float32),
        grid=(Bp // Bb,),                              # batch-split grid: pipelining + v7x megacore
        in_specs=[
            pl.BlockSpec((Bb, 1), lambda i: (i, 0)),
            pl.BlockSpec((T, Bb, E), lambda i: (0, i, 0)),
            pl.BlockSpec((E, 8 * H), lambda i: (0, 0)),
            pl.BlockSpec((H, 4 * H), lambda i: (0, 0)),
            pl.BlockSpec((H, 4 * H), lambda i: (0, 0)),
            pl.BlockSpec((1, 8 * H), lambda i: (0, 0)),
        ],
        out_specs=pl.BlockSpec((T, Bb, 2 * H), lambda i: (0, i, 0)),
        scratch_shapes=[pltpu.VMEM((T, Bb, 8 * H), jnp.bfloat16)],   # x @ [Wih_f | Wih_b] + b
        compiler_params=pltpu.CompilerParams(
            dimension_semantics=("parallel",),
            vmem_limit_bytes=vmem_limit),
    )(lens, x_tbe, wih_cat, whh_f, whh_b, b_cat)


# ----------------------------------- Parameter setup -----------------------------------
def init_params(key, n_symbols, padding_idx, embedding_dim, rnn_size,
                n_conv_blocks=3, kernel_size=5):
    E = embedding_dim
    H = rnn_size // 2
    keys = jax.random.split(key, 1 + 2 * n_conv_blocks + 8)
    ki = iter(keys)

    table = 0.1 * jax.random.normal(next(ki), (n_symbols, E), jnp.float32)
    table = table.at[padding_idx].set(0.0)                # nn.Embedding padding_idx row

    eps = 1e-5
    bn_scale = 1.0 / jnp.sqrt(1.0 + eps)                  # gamma=1, running_var=1 (eval mode)
    w_list, scale_list, shift_list = [], [], []
    for _ in range(n_conv_blocks):
        w = 0.1 * jax.random.normal(next(ki), (E, E, kernel_size), jnp.float32)  # (out, in, K)
        bias = 0.05 * jax.random.normal(next(ki), (E,), jnp.float32)
        w_kio = jnp.transpose(w, (2, 1, 0)).reshape(kernel_size * E, E)           # (K*in, out)
        w_list.append(w_kio)
        scale_list.append(jnp.full((1, E), bn_scale, jnp.float32))
        shift_list.append((bias * bn_scale).reshape(1, E))                        # folded bias+BN
    w_stack = jnp.stack(w_list).astype(jnp.bfloat16)      # (L, K*E, E) bf16 matmul operand
    scale_stack = jnp.stack(scale_list)                   # (L, 1, E)
    shift_stack = jnp.stack(shift_list)                   # (L, 1, E)

    def lstm_dir(k1, k2, k3, k4):
        w_ih = 0.1 * jax.random.normal(k1, (4 * H, E), jnp.float32)
        w_hh = 0.1 * jax.random.normal(k2, (4 * H, H), jnp.float32)
        b_ih = 0.05 * jax.random.normal(k3, (4 * H,), jnp.float32)
        b_hh = 0.05 * jax.random.normal(k4, (4 * H,), jnp.float32)
        return w_ih.T, w_hh.T, (b_ih + b_hh)              # (E,4H), (H,4H), (4H,)

    wih_f, whh_f, b_f = lstm_dir(next(ki), next(ki), next(ki), next(ki))
    wih_b, whh_b, b_b = lstm_dir(next(ki), next(ki), next(ki), next(ki))
    wih_cat = jnp.concatenate([wih_f, wih_b], axis=1).astype(jnp.bfloat16)   # (E, 8H) bf16
    b_cat = jnp.concatenate([b_f, b_b]).reshape(1, 8 * H)                    # f32 bias

    return {
        "embedding": table,
        "conv": (w_stack, scale_stack, shift_stack),
        "lstm": (wih_cat, whh_f.astype(jnp.bfloat16), whh_b.astype(jnp.bfloat16), b_cat),
    }


# ----------------------------------- Encoder forward -----------------------------------
def encoder_forward(params, x_ids, input_lengths, conv_block_batch=8, lstm_block_batch=8):
    B, T = x_ids.shape
    Bp = ((B + 7) // 8) * 8                               # pad batch to full sublane groups once
    ids = jnp.pad(x_ids.astype(jnp.int32), ((0, Bp - B), (0, 0)))
    lens = jnp.pad(input_lengths.astype(jnp.int32), (0, Bp - B))   # padded rows: length 0

    h = embedding_lookup(ids, params["embedding"])                        # (T, Bp, E) bf16
    h = conv_stack(h, *params["conv"], block_batch=conv_block_batch)      # (T, Bp, E) bf16
    out = bilstm(h, lens, *params["lstm"], block_batch=lstm_block_batch)  # (T, Bp, 2H) f32
    return jnp.transpose(out[:, :B, :], (1, 0, 2))                        # (B, T, rnn_size)


if __name__ == "__main__":
    key = jax.random.PRNGKey(0)
    B, T = 2, 16
    n_symbols, padding_idx = 40, 0
    embedding_dim, rnn_size = 128, 256   # small but (8,128)-aligned: E=128, H=128

    kp, kx = jax.random.split(key)
    params = init_params(kp, n_symbols, padding_idx, embedding_dim, rnn_size)

    # Lengths sorted descending (enforce_sorted=True); max length == T (total_length).
    input_lengths = jnp.array([16, 11], dtype=jnp.int32)
    ids = jax.random.randint(kx, (B, T), 1, n_symbols, dtype=jnp.int32)
    pos = jnp.arange(T)[None, :]
    ids = jnp.where(pos < input_lengths[:, None], ids, padding_idx)  # padded tokens

    out = encoder_forward(params, ids, input_lengths)
    jax.block_until_ready(out)
    assert out.shape == (B, T, rnn_size)
    print("KERNEL_OK")
</pallas_src>

<mosaic_0001>
module attributes {stable_mosaic.version = 11 : i64} {
  func.func @conv_stack_kernel(%arg0: i32, %arg1: memref<16x8x128xbf16, #tpu.memory_space<vmem>>, %arg2: memref<3x640x128xbf16, #tpu.memory_space<vmem>>, %arg3: memref<3x1x128xf32, #tpu.memory_space<vmem>>, %arg4: memref<3x1x128xf32, #tpu.memory_space<vmem>>, %arg5: memref<16x8x128xbf16, #tpu.memory_space<vmem>>, %arg6: memref<20x8x128xbf16, #tpu.memory_space<vmem>>) attributes {dimension_semantics = [#tpu.dimension_semantics<parallel>], iteration_bounds = array<i64: 1>, scalar_prefetch = 0 : i64, scratch_operands = 1 : i64, tpu.core_type = #tpu.core_type<tc>, window_params = [{transform_indices = @transform_0, window_bounds = array<i64: 16, 8, 128>}, {pipeline_mode = #tpu.pipeline_mode<synchronous>, transform_indices = @transform_1, window_bounds = array<i64: 3, 640, 128>}, {pipeline_mode = #tpu.pipeline_mode<synchronous>, transform_indices = @transform_2, window_bounds = array<i64: 3, 1, 128>}, {pipeline_mode = #tpu.pipeline_mode<synchronous>, transform_indices = @transform_3, window_bounds = array<i64: 3, 1, 128>}, {transform_indices = @transform_4, window_bounds = array<i64: 16, 8, 128>}]} {
    %cst = arith.constant 0.000000e+00 : bf16
    %0 = vector.broadcast %cst : bf16 to vector<2x8x128xbf16>
    %c0 = arith.constant 0 : index
    %c0_0 = arith.constant 0 : index
    %c0_1 = arith.constant 0 : index
    %1 = vector.load %arg6[%c0, %c0_0, %c0_1] : memref<20x8x128xbf16, #tpu.memory_space<vmem>>, vector<2x8x128xbf16>
    tpu.vector_store %arg6[%c0, %c0_0, %c0_1], %0 {strides = array<i32>} : memref<20x8x128xbf16, #tpu.memory_space<vmem>>, vector<2x8x128xbf16>,
    %c18 = arith.constant 18 : index
    %c0_2 = arith.constant 0 : index
    %c0_3 = arith.constant 0 : index
    %2 = vector.load %arg6[%c18, %c0_2, %c0_3] : memref<20x8x128xbf16, #tpu.memory_space<vmem>>, vector<2x8x128xbf16>
    tpu.vector_store %arg6[%c18, %c0_2, %c0_3], %0 {strides = array<i32>} : memref<20x8x128xbf16, #tpu.memory_space<vmem>>, vector<2x8x128xbf16>,
    %c0_4 = arith.constant 0 : index
    %c0_5 = arith.constant 0 : index
    %c0_6 = arith.constant 0 : index
    %3 = vector.load %arg1[%c0_4, %c0_5, %c0_6] : memref<16x8x128xbf16, #tpu.memory_space<vmem>>, vector<16x8x128xbf16>
    %c2 = arith.constant 2 : index
    %c0_7 = arith.constant 0 : index
    %c0_8 = arith.constant 0 : index
    %4 = vector.load %arg6[%c2, %c0_7, %c0_8] : memref<20x8x128xbf16, #tpu.memory_space<vmem>>, vector<16x8x128xbf16>
    tpu.vector_store %arg6[%c2, %c0_7, %c0_8], %3 {strides = array<i32>} : memref<20x8x128xbf16, #tpu.memory_space<vmem>>, vector<16x8x128xbf16>,
    %c0_9 = arith.constant 0 : index
    %c0_10 = arith.constant 0 : index
    %c0_11 = arith.constant 0 : index
    %5 = vector.load %arg6[%c0_9, %c0_10, %c0_11] : memref<20x8x128xbf16, #tpu.memory_space<vmem>>, vector<20x8x128xbf16>
    %6 = vector.extract_strided_slice %5 {offsets = [0, 0, 0], sizes = [16, 8, 128], strides = [1, 1, 1]} : vector<20x8x128xbf16> to vector<16x8x128xbf16>
    %7 = vector.extract_strided_slice %5 {offsets = [1, 0, 0], sizes = [16, 8, 128], strides = [1, 1, 1]} : vector<20x8x128xbf16> to vector<16x8x128xbf16>
    %8 = vector.extract_strided_slice %5 {offsets = [2, 0, 0], sizes = [16, 8, 128], strides = [1, 1, 1]} : vector<20x8x128xbf16> to vector<16x8x128xbf16>
    %9 = vector.extract_strided_slice %5 {offsets = [3, 0, 0], sizes = [16, 8, 128], strides = [1, 1, 1]} : vector<20x8x128xbf16> to vector<16x8x128xbf16>
    %10 = vector.extract_strided_slice %5 {offsets = [4, 0, 0], sizes = [16, 8, 128], strides = [1, 1, 1]} : vector<20x8x128xbf16> to vector<16x8x128xbf16>
    %11 = tpu.concatenate %6, %7, %8, %9, %10 in 2 : vector<16x8x128xbf16>, vector<16x8x128xbf16>, vector<16x8x128xbf16>, vector<16x8x128xbf16>, vector<16x8x128xbf16> -> vector<16x8x640xbf16>
    %12 = vector.shape_cast %11 : vector<16x8x640xbf16> to vector<128x640xbf16>
    %c0_12 = arith.constant 0 : index
    %c0_13 = arith.constant 0 : index
    %c0_14 = arith.constant 0 : index
    %13 = vector.load %arg2[%c0_12, %c0_13, %c0_14] : memref<3x640x128xbf16, #tpu.memory_space<vmem>>, vector<1x640x128xbf16>
    %14 = vector.shape_cast %13 : vector<1x640x128xbf16> to vector<640x128xbf16>
    %cst_15 = arith.constant dense<0.000000e+00> : vector<128x128xf32>
    %15 = tpu.matmul %12, %14, %cst_15 {dimension_numbers = #tpu.dot_dimension_numbers<[1], [0], [0], [1], [0, 0, 1, 1], [], []>} : vector<128x640xbf16>, vector<640x128xbf16>, vector<128x128xf32> -> vector<128x128xf32>
    %c0_16 = arith.constant 0 : index
    %c0_17 = arith.constant 0 : index
    %c0_18 = arith.constant 0 : index
    %16 = vector.load %arg3[%c0_16, %c0_17, %c0_18] : memref<3x1x128xf32, #tpu.memory_space<vmem>>, vector<1x1x128xf32>
    %17 = vector.shape_cast %16 : vector<1x1x128xf32> to vector<1x128xf32>
    %18 = vector.broadcast %17 : vector<1x128xf32> to vector<128x128xf32>
    %19 = arith.mulf %15, %18 : vector<128x128xf32>
    %c0_19 = arith.constant 0 : index
    %c0_20 = arith.constant 0 : index
    %c0_21 = arith.constant 0 : index
    %20 = vector.load %arg4[%c0_19, %c0_20, %c0_21] : memref<3x1x128xf32, #tpu.memory_space<vmem>>, vector<1x1x128xf32>
    %21 = vector.shape_cast %20 : vector<1x1x128xf32> to vector<1x128xf32>
    %22 = vector.broadcast %21 : vector<1x128xf32> to vector<128x128xf32>
    %23 = arith.addf %19, %22 : vector<128x128xf32>
    %cst_22 = arith.constant 0.000000e+00 : f32
    %24 = vector.broadcast %cst_22 : f32 to vector<128x128xf32>
    %25 = arith.maximumf %23, %24 : vector<128x128xf32>
    %26 = arith.truncf %25 : vector<128x128xf32> to vector<128x128xbf16>
    %27 = vector.shape_cast %26 : vector<128x128xbf16> to vector<16x8x128xbf16>
    %c2_23 = arith.constant 2 : index
    %c0_24 = arith.constant 0 : index
    %c0_25 = arith.constant 0 : index
    %28 = vector.load %arg6[%c2_23, %c0_24, %c0_25] : memref<20x8x128xbf16, #tpu.memory_space<vmem>>, vector<16x8x128xbf16>
    tpu.vector_store %arg6[%c2_23, %c0_24, %c0_25], %27 {strides = array<i32>} : memref<20x8x128xbf16, #tpu.memory_space<vmem>>, vector<16x8x128xbf16>,
    %c0_26 = arith.constant 0 : index
    %c0_27 = arith.constant 0 : index
    %c0_28 = arith.constant 0 : index
    %29 = vector.load %arg6[%c0_26, %c0_27, %c0_28] : memref<20x8x128xbf16, #tpu.memory_space<vmem>>, vector<20x8x128xbf16>
    %30 = vector.extract_strided_slice %29 {offsets = [0, 0, 0], sizes = [16, 8, 128], strides = [1, 1, 1]} : vector<20x8x128xbf16> to vector<16x8x128xbf16>
    %31 = vector.extract_strided_slice %29 {offsets = [1, 0, 0], sizes = [16, 8, 128], strides = [1, 1, 1]} : vector<20x8x128xbf16> to vector<16x8x128xbf16>
    %32 = vector.extract_strided_slice %29 {offsets = [2, 0, 0], sizes = [16, 8, 128], strides = [1, 1, 1]} : vector<20x8x128xbf16> to vector<16x8x128xbf16>
    %33 = vector.extract_strided_slice %29 {offsets = [3, 0, 0], sizes = [16, 8, 128], strides = [1, 1, 1]} : vector<20x8x128xbf16> to vector<16x8x128xbf16>
    %34 = vector.extract_strided_slice %29 {offsets = [4, 0, 0], sizes = [16, 8, 128], strides = [1, 1, 1]} : vector<20x8x128xbf16> to vector<16x8x128xbf16>
    %35 = tpu.concatenate %30, %31, %32, %33, %34 in 2 : vector<16x8x128xbf16>, vector<16x8x128xbf16>, vector<16x8x128xbf16>, vector<16x8x128xbf16>, vector<16x8x128xbf16> -> vector<16x8x640xbf16>
    %36 = vector.shape_cast %35 : vector<16x8x640xbf16> to vector<128x640xbf16>
    %c1 = arith.constant 1 : index
    %c0_29 = arith.constant 0 : index
    %c0_30 = arith.constant 0 : index
    %37 = vector.load %arg2[%c1, %c0_29, %c0_30] : memref<3x640x128xbf16, #tpu.memory_space<vmem>>, vector<1x640x128xbf16>
    %38 = vector.shape_cast %37 : vector<1x640x128xbf16> to vector<640x128xbf16>
    %cst_31 = arith.constant dense<0.000000e+00> : vector<128x128xf32>
    %39 = tpu.matmul %36, %38, %cst_31 {dimension_numbers = #tpu.dot_dimension_numbers<[1], [0], [0], [1], [0, 0, 1, 1], [], []>} : vector<128x640xbf16>, vector<640x128xbf16>, vector<128x128xf32> -> vector<128x128xf32>
    %c1_32 = arith.constant 1 : index
    %c0_33 = arith.constant 0 : index
    %c0_34 = arith.constant 0 : index
    %40 = vector.load %arg3[%c1_32, %c0_33, %c0_34] : memref<3x1x128xf32, #tpu.memory_space<vmem>>, vector<1x1x128xf32>
    %41 = vector.shape_cast %40 : vector<1x1x128xf32> to vector<1x128xf32>
    %42 = vector.broadcast %41 : vector<1x128xf32> to vector<128x128xf32>
    %43 = arith.mulf %39, %42 : vector<128x128xf32>
    %c1_35 = arith.constant 1 : index
    %c0_36 = arith.constant 0 : index
    %c0_37 = arith.constant 0 : index
    %44 = vector.load %arg4[%c1_35, %c0_36, %c0_37] : memref<3x1x128xf32, #tpu.memory_space<vmem>>, vector<1x1x128xf32>
    %45 = vector.shape_cast %44 : vector<1x1x128xf32> to vector<1x128xf32>
    %46 = vector.broadcast %45 : vector<1x128xf32> to vector<128x128xf32>
    %47 = arith.addf %43, %46 : vector<128x128xf32>
    %cst_38 = arith.constant 0.000000e+00 : f32
    %48 = vector.broadcast %cst_38 : f32 to vector<128x128xf32>
    %49 = arith.maximumf %47, %48 : vector<128x128xf32>
    %50 = arith.truncf %49 : vector<128x128xf32> to vector<128x128xbf16>
    %51 = vector.shape_cast %50 : vector<128x128xbf16> to vector<16x8x128xbf16>
    %c2_39 = arith.constant 2 : index
    %c0_40 = arith.constant 0 : index
    %c0_41 = arith.constant 0 : index
    %52 = vector.load %arg6[%c2_39, %c0_40, %c0_41] : memref<20x8x128xbf16, #tpu.memory_space<vmem>>, vector<16x8x128xbf16>
    tpu.vector_store %arg6[%c2_39, %c0_40, %c0_41], %51 {strides = array<i32>} : memref<20x8x128xbf16, #tpu.memory_space<vmem>>, vector<16x8x128xbf16>,
    %c0_42 = arith.constant 0 : index
    %c0_43 = arith.constant 0 : index
    %c0_44 = arith.constant 0 : index
    %53 = vector.load %arg6[%c0_42, %c0_43, %c0_44] : memref<20x8x128xbf16, #tpu.memory_space<vmem>>, vector<20x8x128xbf16>
    %54 = vector.extract_strided_slice %53 {offsets = [0, 0, 0], sizes = [16, 8, 128], strides = [1, 1, 1]} : vector<20x8x128xbf16> to vector<16x8x128xbf16>
    %55 = vector.extract_strided_slice %53 {offsets = [1, 0, 0], sizes = [16, 8, 128], strides = [1, 1, 1]} : vector<20x8x128xbf16> to vector<16x8x128xbf16>
    %56 = vector.extract_strided_slice %53 {offsets = [2, 0, 0], sizes = [16, 8, 128], strides = [1, 1, 1]} : vector<20x8x128xbf16> to vector<16x8x128xbf16>
    %57 = vector.extract_strided_slice %53 {offsets = [3, 0, 0], sizes = [16, 8, 128], strides = [1, 1, 1]} : vector<20x8x128xbf16> to vector<16x8x128xbf16>
    %58 = vector.extract_strided_slice %53 {offsets = [4, 0, 0], sizes = [16, 8, 128], strides = [1, 1, 1]} : vector<20x8x128xbf16> to vector<16x8x128xbf16>
    %59 = tpu.concatenate %54, %55, %56, %57, %58 in 2 : vector<16x8x128xbf16>, vector<16x8x128xbf16>, vector<16x8x128xbf16>, vector<16x8x128xbf16>, vector<16x8x128xbf16> -> vector<16x8x640xbf16>
    %60 = vector.shape_cast %59 : vector<16x8x640xbf16> to vector<128x640xbf16>
    %c2_45 = arith.constant 2 : index
    %c0_46 = arith.constant 0 : index
    %c0_47 = arith.constant 0 : index
    %61 = vector.load %arg2[%c2_45, %c0_46, %c0_47] : memref<3x640x128xbf16, #tpu.memory_space<vmem>>, vector<1x640x128xbf16>
    %62 = vector.shape_cast %61 : vector<1x640x128xbf16> to vector<640x128xbf16>
    %cst_48 = arith.constant dense<0.000000e+00> : vector<128x128xf32>
    %63 = tpu.matmul %60, %62, %cst_48 {dimension_numbers = #tpu.dot_dimension_numbers<[1], [0], [0], [1], [0, 0, 1, 1], [], []>} : vector<128x640xbf16>, vector<640x128xbf16>, vector<128x128xf32> -> vector<128x128xf32>
    %c2_49 = arith.constant 2 : index
    %c0_50 = arith.constant 0 : index
    %c0_51 = arith.constant 0 : index
    %64 = vector.load %arg3[%c2_49, %c0_50, %c0_51] : memref<3x1x128xf32, #tpu.memory_space<vmem>>, vector<1x1x128xf32>
    %65 = vector.shape_cast %64 : vector<1x1x128xf32> to vector<1x128xf32>
    %66 = vector.broadcast %65 : vector<1x128xf32> to vector<128x128xf32>
    %67 = arith.mulf %63, %66 : vector<128x128xf32>
    %c2_52 = arith.constant 2 : index
    %c0_53 = arith.constant 0 : index
    %c0_54 = arith.constant 0 : index
    %68 = vector.load %arg4[%c2_52, %c0_53, %c0_54] : memref<3x1x128xf32, #tpu.memory_space<vmem>>, vector<1x1x128xf32>
    %69 = vector.shape_cast %68 : vector<1x1x128xf32> to vector<1x128xf32>
    %70 = vector.broadcast %69 : vector<1x128xf32> to vector<128x128xf32>
    %71 = arith.addf %67, %70 : vector<128x128xf32>
    %cst_55 = arith.constant 0.000000e+00 : f32
    %72 = vector.broadcast %cst_55 : f32 to vector<128x128xf32>
    %73 = arith.maximumf %71, %72 : vector<128x128xf32>
    %74 = arith.truncf %73 : vector<128x128xf32> to vector<128x128xbf16>
    %75 = vector.shape_cast %74 : vector<128x128xbf16> to vector<16x8x128xbf16>
    %c0_56 = arith.constant 0 : index
    %c0_57 = arith.constant 0 : index
    %c0_58 = arith.constant 0 : index
    %76 = vector.load %arg5[%c0_56, %c0_57, %c0_58] : memref<16x8x128xbf16, #tpu.memory_space<vmem>>, vector<16x8x128xbf16>
    tpu.vector_store %arg5[%c0_56, %c0_57, %c0_58], %75 {strides = array<i32>} : memref<16x8x128xbf16, #tpu.memory_space<vmem>>, vector<16x8x128xbf16>,
    return
  }
  func.func @transform_0(%arg0: i32) -> (i32, i32, i32) {
    %c0_i32 = arith.constant 0 : i32
    %c0_i32_0 = arith.constant 0 : i32
    %c0_i32_1 = arith.constant 0 : i32
    return %c0_i32, %arg0, %c0_i32_0 : i32, i32, i32
  }
  func.func @transform_1(%arg0: i32) -> (i32, i32, i32) {
    %c0_i32 = arith.constant 0 : i32
    %c0_i32_0 = arith.constant 0 : i32
    %c0_i32_1 = arith.constant 0 : i32
    %c0_i32_2 = arith.constant 0 : i32
    return %c0_i32, %c0_i32_0, %c0_i32_1 : i32, i32, i32
  }
  func.func @transform_2(%arg0: i32) -> (i32, i32, i32) {
    %c0_i32 = arith.constant 0 : i32
    %c0_i32_0 = arith.constant 0 : i32
    %c0_i32_1 = arith.constant 0 : i32
    %c0_i32_2 = arith.constant 0 : i32
    return %c0_i32, %c0_i32_0, %c0_i32_1 : i32, i32, i32
  }
  func.func @transform_3(%arg0: i32) -> (i32, i32, i32) {
    %c0_i32 = arith.constant 0 : i32
    %c0_i32_0 = arith.constant 0 : i32
    %c0_i32_1 = arith.constant 0 : i32
    %c0_i32_2 = arith.constant 0 : i32
    return %c0_i32, %c0_i32_0, %c0_i32_1 : i32, i32, i32
  }
  func.func @transform_4(%arg0: i32) -> (i32, i32, i32) {
    %c0_i32 = arith.constant 0 : i32
    %c0_i32_0 = arith.constant 0 : i32
    %c0_i32_1 = arith.constant 0 : i32
    return %c0_i32, %arg0, %c0_i32_0 : i32, i32, i32
  }
}

</mosaic_0001>

<llo_original>
// kernel: tpu_custom_call.1
$region0: #{tpu_custom_call.1}
  #allocation0 [shape = 'u32[]', space=smem, size = 0x4, offset = 0x4, fixed_abs, tag = 'smem constant byte address 0x4 - core index']
  #allocation1 [shape = 'u32[72,128]{1,0:T(1,128)}', space=vmem, size = 0x9000, scoped, tag = 'internal scratch']
  #allocation2 [shape = 'bf16[20,8,128]{2,1,0:T(8,128)(2,1)}', space=vmem, size = 0xa000, scoped, tag = 'scratch operand']
  %s0 = inlined_call_operand.hbm [shape: bf16[16,8,128], index: 0, kind: input, shape index: {}]
  %s1 = inlined_call_operand.hbm [shape: bf16[3,640,128], index: 1, kind: input, shape index: {}]
  %s2 = inlined_call_operand.hbm [shape: f32[3,1,128], index: 2, kind: input, shape index: {}]
  %s3 = inlined_call_operand.hbm [shape: f32[3,1,128], index: 3, kind: input, shape index: {}]
  %s4 = inlined_call_operand.hbm [shape: bf16[16,8,128], index: 4, kind: output, shape index: {}]
  %s5 = sld [smem:[#allocation0]]
  $region42: #{tpu_custom_call.1} parent=0
    _
  %s7 = ssub.s32 1, %s5
  %s8 = scalar_select 0, %s7, %s5
  $region1: #{tpu_custom_call.1} parent=0
    #allocation3 [shape = 'u8[32768]{0}', space=vmem, size = 0x8000, scoped, tag = 'input window, operand 0, single buffered']
    #allocation4 [shape = 's32[1]{0}', space=sflag, size = 0x4, scoped, tag = 'scoped memory for tpu_custom_call.1']
    #allocation5 [shape = 's32[1]{0}', space=sflag, size = 0x4, scoped, tag = 'scoped memory for tpu_custom_call.1']
    #allocation6 [shape = 'u8[491520]{0}', space=vmem, size = 0x78000, scoped, tag = 'input window, operand 1, single buffered']
    #allocation7 [shape = 's32[1]{0}', space=sflag, size = 0x4, scoped, tag = 'scoped memory for tpu_custom_call.1']
    #allocation8 [shape = 'u8[1536]{0}', space=vmem, size = 0x800, scoped, tag = 'input window, operand 2, single buffered']
    #allocation9 [shape = 'u8[1536]{0}', space=vmem, size = 0x800, scoped, tag = 'input window, operand 3, single buffered']
    #allocation10 [shape = 's32[1]{0}', space=sflag, size = 0x4, scoped, tag = 'scoped memory for tpu_custom_call.1']
    #allocation11 [shape = 'u8[32768]{0}', space=vmem, size = 0x8000, scoped, tag = 'output window, operand 0, single buffered']
    %9 = vsyncpa [#allocation4], 0
    %10 = vsyncpa [#allocation7], 0
    %11 = vsyncpa [#allocation10], 0
    %12 = vsyncpa [#allocation5], 0
    // Predicated region
    $region2: #{tpu_custom_call.1} parent=1 // pred_check
      _
    $region3: #{tpu_custom_call.1} parent=1 // pred_check_branch
      %14 = sbr.rel (0) target = $region5
    $region4: #{tpu_custom_call.1} parent=1 // pred_region
      %16 = vsyncadd [#allocation4], 0
      %s17 = sshll.u32 %s0, 4
      %s18 = int_to_ptr.hbm [resolvable:$true] %s17
      %s19 = sshll.u32 [#allocation3], 4
      %s20 = int_to_ptr.vmem [resolvable:$true] %s19
      %25 = dma.hbm_to_vmem [thread:$0]  %s18, 1024, %s20, [#allocation4], 64, 64, 4
    $region5: #{tpu_custom_call.1} parent=1 // pred_fallthru
      _
    // Predicated region
    $region6: #{tpu_custom_call.1} parent=1 // pred_check
      _
    $region7: #{tpu_custom_call.1} parent=1 // pred_check_branch
      %27 = sbr.rel (0) target = $region9
    $region8: #{tpu_custom_call.1} parent=1 // pred_region
      %29 = vsyncadd [#allocation7], 0
      %s30 = sshll.u32 %s1, 4
      %s31 = int_to_ptr.hbm [resolvable:$true] %s30
      %s32 = sshll.u32 [#allocation6], 4
      %s33 = int_to_ptr.vmem [resolvable:$true] %s32
      %38 = dma.hbm_to_vmem [thread:$0]  %s31, 15360, %s33, [#allocation7], 64, 64, 4
    $region9: #{tpu_custom_call.1} parent=1 // pred_fallthru
      _
    // Predicated region
    $region10: #{tpu_custom_call.1} parent=1 // pred_check
      _
    $region11: #{tpu_custom_call.1} parent=1 // pred_check_branch
      %40 = sbr.rel (0) target = $region13
    $region12: #{tpu_custom_call.1} parent=1 // pred_region
      %42 = vsyncadd [#allocation7], 0
      %s43 = sshll.u32 %s2, 4
      %s44 = int_to_ptr.hbm [resolvable:$true] %s43
      %s45 = sshll.u32 [#allocation8], 4
      %s46 = int_to_ptr.vmem [resolvable:$true] %s45
      %51 = dma.hbm_to_vmem [thread:$0]  %s44, 48, %s46, [#allocation7], 16, 16, 1
    $region13: #{tpu_custom_call.1} parent=1 // pred_fallthru
      _
    // Predicated region
    $region14: #{tpu_custom_call.1} parent=1 // pred_check
      _
    $region15: #{tpu_custom_call.1} parent=1 // pred_check_branch
      %53 = sbr.rel (0) target = $region17
    $region16: #{tpu_custom_call.1} parent=1 // pred_region
      %55 = vsyncadd [#allocation10], 0
      %s56 = sshll.u32 %s3, 4
      %s57 = int_to_ptr.hbm [resolvable:$true] %s56
      %s58 = sshll.u32 [#allocation9], 4
      %s59 = int_to_ptr.vmem [resolvable:$true] %s58
      %64 = dma.hbm_to_vmem [thread:$0]  %s57, 48, %s59, [#allocation10], 16, 16, 1
    $region17: #{tpu_custom_call.1} parent=1 // pred_fallthru
      _
    // Predicated region
    $region18: #{tpu_custom_call.1} parent=1 // pred_check
      _
    $region19: #{tpu_custom_call.1} parent=1 // pred_check_branch
      %66 = sbr.rel (0) target = $region21
    $region20: #{tpu_custom_call.1} parent=1 // pred_region
      %68 = dma.done [#allocation4], 1024
    $region21: #{tpu_custom_call.1} parent=1 // pred_fallthru
      _
    // Predicated region
    $region22: #{tpu_custom_call.1} parent=1 // pred_check
      _
    $region23: #{tpu_custom_call.1} parent=1 // pred_check_branch
      %70 = sbr.rel (0) target = $region25
    $region24: #{tpu_custom_call.1} parent=1 // pred_region
      %72 = dma.done [#allocation7], 15360
    $region25: #{tpu_custom_call.1} parent=1 // pred_fallthru
      _
    // Predicated region
    $region26: #{tpu_custom_call.1} parent=1 // pred_check
      _
    $region27: #{tpu_custom_call.1} parent=1 // pred_check_branch
      %74 = sbr.rel (0) target = $region29
    $region28: #{tpu_custom_call.1} parent=1 // pred_region
      %76 = dma.done [#allocation7], 48
    $region29: #{tpu_custom_call.1} parent=1 // pred_fallthru
      _
    // Predicated region
    $region30: #{tpu_custom_call.1} parent=1 // pred_check
      _
    $region31: #{tpu_custom_call.1} parent=1 // pred_check_branch
      %78 = sbr.rel (0) target = $region33
    $region32: #{tpu_custom_call.1} parent=1 // pred_region
      %80 = dma.done [#allocation10], 48
    $region33: #{tpu_custom_call.1} parent=1 // pred_fallthru
      _
    %82 = vst [vmem:[#allocation2] sm:$0xf] 0
    %83 = vst [vmem:[#allocation2 + $0x4] sm:$0xf] 0
    %s84 = scalar_lea.vmem [#allocation2], 72
    %85 = vst [vmem:[%s84] sm:$0xf] 0
    %86 = vst [vmem:[%s84 + $0x4] sm:$0xf] 0
    %v87 = vld [vmem:[#allocation3] sm:$0xf]
    %v88 = vld [vmem:[#allocation3 + $0x4] sm:$0xf]
    %v89 = vld [vmem:[#allocation3 + $0x8] sm:$0xf]
    %v90 = vld [vmem:[#allocation3 + $0xc] sm:$0xf]
    %v91 = vld [vmem:[#allocation3 + $0x10] sm:$0xf]
    %v92 = vld [vmem:[#allocation3 + $0x14] sm:$0xf]
    %v93 = vld [vmem:[#allocation3 + $0x18] sm:$0xf]
    %v94 = vld [vmem:[#allocation3 + $0x1c] sm:$0xf]
    %v95 = vld [vmem:[#allocation3 + $0x20] sm:$0xf]
    %v96 = vld [vmem:[#allocation3 + $0x24] sm:$0xf]
    %v97 = vld [vmem:[#allocation3 + $0x28] sm:$0xf]
    %v98 = vld [vmem:[#allocation3 + $0x2c] sm:$0xf]
    %v99 = vld [vmem:[#allocation3 + $0x30] sm:$0xf]
    %v100 = vld [vmem:[#allocation3 + $0x34] sm:$0xf]
    %v101 = vld [vmem:[#allocation3 + $0x38] sm:$0xf]
    %v102 = vld [vmem:[#allocation3 + $0x3c] sm:$0xf]
    %s103 = scalar_lea.vmem [#allocation2], 8
    %104 = vst [vmem:[%s103] sm:$0xf] %v87
    %105 = vst [vmem:[%s103 + $0x4] sm:$0xf] %v88
    %106 = vst [vmem:[%s103 + $0x8] sm:$0xf] %v89
    %107 = vst [vmem:[%s103 + $0xc] sm:$0xf] %v90
    %108 = vst [vmem:[%s103 + $0x10] sm:$0xf] %v91
    %109 = vst [vmem:[%s103 + $0x14] sm:$0xf] %v92
    %110 = vst [vmem:[%s103 + $0x18] sm:$0xf] %v93
    %111 = vst [vmem:[%s103 + $0x1c] sm:$0xf] %v94
    %112 = vst [vmem:[%s103 + $0x20] sm:$0xf] %v95
    %113 = vst [vmem:[%s103 + $0x24] sm:$0xf] %v96
    %114 = vst [vmem:[%s103 + $0x28] sm:$0xf] %v97
    %115 = vst [vmem:[%s103 + $0x2c] sm:$0xf] %v98
    %116 = vst [vmem:[%s103 + $0x30] sm:$0xf] %v99
    %117 = vst [vmem:[%s103 + $0x34] sm:$0xf] %v100
    %118 = vst [vmem:[%s103 + $0x38] sm:$0xf] %v101
    %119 = vst [vmem:[%s103 + $0x3c] sm:$0xf] %v102
    %v120 = vld [vmem:[#allocation2] sm:$0xf]
    %v121 = vld [vmem:[#allocation2 + $0x4] sm:$0xf]
    %v122 = vld [vmem:[#allocation2 + $0x8] sm:$0xf]
    %v123 = vld [vmem:[#allocation2 + $0xc] sm:$0xf]
    %v124 = vld [vmem:[#allocation2 + $0x10] sm:$0xf]
    %v125 = vld [vmem:[#allocation2 + $0x14] sm:$0xf]
    %v126 = vld [vmem:[#allocation2 + $0x18] sm:$0xf]
    %v127 = vld [vmem:[#allocation2 + $0x1c] sm:$0xf]
    %v128 = vld [vmem:[#allocation2 + $0x20] sm:$0xf]
    %v129 = vld [vmem:[#allocation2 + $0x24] sm:$0xf]
    %v130 = vld [vmem:[#allocation2 + $0x28] sm:$0xf]
    %v131 = vld [vmem:[#allocation2 + $0x2c] sm:$0xf]
    %v132 = vld [vmem:[#allocation2 + $0x30] sm:$0xf]
    %v133 = vld [vmem:[#allocation2 + $0x34] sm:$0xf]
    %v134 = vld [vmem:[#allocation2 + $0x38] sm:$0xf]
    %v135 = vld [vmem:[#allocation2 + $0x3c] sm:$0xf]
    %v136 = vld [vmem:[#allocation2 + $0x40] sm:$0xf]
    %v137 = vld [vmem:[#allocation2 + $0x44] sm:$0xf]
    %v138 = vld [vmem:[#allocation2 + $0x48] sm:$0xf]
    %v139 = vld [vmem:[#allocation2 + $0x4c] sm:$0xf]
    %v160 = vunpack.c.l.b16 %v120
    %v161 = vunpack.c.l.b16 %v121
    %v162 = vunpack.c.l.b16 %v122
    %v163 = vunpack.c.l.b16 %v123
    %v164 = vunpack.c.l.b16 %v124
    %v165 = vunpack.c.l.b16 %v125
    %v166 = vunpack.c.l.b16 %v126
    %v167 = vunpack.c.l.b16 %v127
    %v168 = vunpack.c.l.b16 %v128
    %v169 = vunpack.c.l.b16 %v129
    %v170 = vunpack.c.l.b16 %v130
    %v171 = vunpack.c.l.b16 %v131
    %v172 = vunpack.c.l.b16 %v132
    %v173 = vunpack.c.l.b16 %v133
    %v174 = vunpack.c.l.b16 %v134
    %v175 = vunpack.c.l.b16 %v135
    %v176 = vunpack.c.l.b16 %v136
    %v177 = vunpack.c.l.b16 %v137
    %v178 = vunpack.c.l.b16 %v138
    %v179 = vunpack.c.l.b16 %v139
    %v180 = vld [vmem:[#allocation6] sm:$0xf]
    %v181 = vld [vmem:[#allocation6 + $0x4] sm:$0xf]
    %v182 = vld [vmem:[#allocation6 + $0x8] sm:$0xf]
    %v183 = vld [vmem:[#allocation6 + $0xc] sm:$0xf]
    %v184 = vld [vmem:[#allocation6 + $0x10] sm:$0xf]
    %v185 = vld [vmem:[#allocation6 + $0x14] sm:$0xf]
    %v186 = vld [vmem:[#allocation6 + $0x18] sm:$0xf]
    %v187 = vld [vmem:[#allocation6 + $0x1c] sm:$0xf]
    %v188 = vld [vmem:[#allocation6 + $0x20] sm:$0xf]
    %v189 = vld [vmem:[#allocation6 + $0x24] sm:$0xf]
    %v190 = vld [vmem:[#allocation6 + $0x28] sm:$0xf]
    %v191 = vld [vmem:[#allocation6 + $0x2c] sm:$0xf]
    %v192 = vld [vmem:[#allocation6 + $0x30] sm:$0xf]
    %v193 = vld [vmem:[#allocation6 + $0x34] sm:$0xf]
    %v194 = vld [vmem:[#allocation6 + $0x38] sm:$0xf]
    %v195 = vld [vmem:[#allocation6 + $0x3c] sm:$0xf]
    %v196 = vld [vmem:[#allocation6 + $0x40] sm:$0xf]
    %v197 = vld [vmem:[#allocation6 + $0x44] sm:$0xf]
    %v198 = vld [vmem:[#allocation6 + $0x48] sm:$0xf]
    %v199 = vld [vmem:[#allocation6 + $0x4c] sm:$0xf]
    %v200 = vld [vmem:[#allocation6 + $0x50] sm:$0xf]
    %v201 = vld [vmem:[#allocation6 + $0x54] sm:$0xf]
    %v202 = vld [vmem:[#allocation6 + $0x58] sm:$0xf]
    %v203 = vld [vmem:[#allocation6 + $0x5c] sm:$0xf]
    %v204 = vld [vmem:[#allocation6 + $0x60] sm:$0xf]
    %v205 = vld [vmem:[#allocation6 + $0x64] sm:$0xf]
    %v206 = vld [vmem:[#allocation6 + $0x68] sm:$0xf]
    %v207 = vld [vmem:[#allocation6 + $0x6c] sm:$0xf]
    %v208 = vld [vmem:[#allocation6 + $0x70] sm:$0xf]
    %v209 = vld [vmem:[#allocation6 + $0x74] sm:$0xf]
    %v210 = vld [vmem:[#allocation6 + $0x78] sm:$0xf]
    %v211 = vld [vmem:[#allocation6 + $0x7c] sm:$0xf]
    %v212 = vld [vmem:[#allocation6 + $0x80] sm:$0xf]
    %v213 = vld [vmem:[#allocation6 + $0x84] sm:$0xf]
    %v214 = vld [vmem:[#allocation6 + $0x88] sm:$0xf]
    %v215 = vld [vmem:[#allocation6 + $0x8c] sm:$0xf]
    %v216 = vld [vmem:[#allocation6 + $0x90] sm:$0xf]
    %v217 = vld [vmem:[#allocation6 + $0x94] sm:$0xf]
    %v218 = vld [vmem:[#allocation6 + $0x98] sm:$0xf]
    %v219 = vld [vmem:[#allocation6 + $0x9c] sm:$0xf]
    %v220 = vld [vmem:[#allocation6 + $0xa0] sm:$0xf]
    %v221 = vld [vmem:[#allocation6 + $0xa4] sm:$0xf]
    %v222 = vld [vmem:[#allocation6 + $0xa8] sm:$0xf]
    %v223 = vld [vmem:[#allocation6 + $0xac] sm:$0xf]
    %v224 = vld [vmem:[#allocation6 + $0xb0] sm:$0xf]
    %v225 = vld [vmem:[#allocation6 + $0xb4] sm:$0xf]
    %v226 = vld [vmem:[#allocation6 + $0xb8] sm:$0xf]
    %v227 = vld [vmem:[#allocation6 + $0xbc] sm:$0xf]
    %v228 = vld [vmem:[#allocation6 + $0xc0] sm:$0xf]
    %v229 = vld [vmem:[#allocation6 + $0xc4] sm:$0xf]
    %v230 = vld [vmem:[#allocation6 + $0xc8] sm:$0xf]
    %v231 = vld [vmem:[#allocation6 + $0xcc] sm:$0xf]
    %v232 = vld [vmem:[#allocation6 + $0xd0] sm:$0xf]
    %v233 = vld [vmem:[#allocation6 + $0xd4] sm:$0xf]
    %v234 = vld [vmem:[#allocation6 + $0xd8] sm:$0xf]
    %v235 = vld [vmem:[#allocation6 + $0xdc] sm:$0xf]
    %v236 = vld [vmem:[#allocation6 + $0xe0] sm:$0xf]
    %v237 = vld [vmem:[#allocation6 + $0xe4] sm:$0xf]
    %v238 = vld [vmem:[#allocation6 + $0xe8] sm:$0xf]
    %v239 = vld [vmem:[#allocation6 + $0xec] sm:$0xf]
    %v240 = vld [vmem:[#allocation6 + $0xf0] sm:$0xf]
    %v241 = vld [vmem:[#allocation6 + $0xf4] sm:$0xf]
    %v242 = vld [vmem:[#allocation6 + $0xf8] sm:$0xf]
    %v243 = vld [vmem:[#allocation6 + $0xfc] sm:$0xf]
    %v244 = vld [vmem:[#allocation6 + $0x100] sm:$0xf]
    %v245 = vld [vmem:[#allocation6 + $0x104] sm:$0xf]
    %v246 = vld [vmem:[#allocation6 + $0x108] sm:$0xf]
    %v247 = vld [vmem:[#allocation6 + $0x10c] sm:$0xf]
    %v248 = vld [vmem:[#allocation6 + $0x110] sm:$0xf]
    %v249 = vld [vmem:[#allocation6 + $0x114] sm:$0xf]
    %v250 = vld [vmem:[#allocation6 + $0x118] sm:$0xf]
    %v251 = vld [vmem:[#allocation6 + $0x11c] sm:$0xf]
    %v252 = vld [vmem:[#allocation6 + $0x120] sm:$0xf]
    %v253 = vld [vmem:[#allocation6 + $0x124] sm:$0xf]
    %v254 = vld [vmem:[#allocation6 + $0x128] sm:$0xf]
    %v255 = vld [vmem:[#allocation6 + $0x12c] sm:$0xf]
    %v256 = vld [vmem:[#allocation6 + $0x130] sm:$0xf]
    %v257 = vld [vmem:[#allocation6 + $0x134] sm:$0xf]
    %v258 = vld [vmem:[#allocation6 + $0x138] sm:$0xf]
    %v259 = vld [vmem:[#allocation6 + $0x13c] sm:$0xf]
    %v260 = vpack.c.b16 %v161, %v160
    %v261 = vpack.c.b16 %v162, %v161
    %v262 = vpack.c.b16 %v163, %v162
    %v263 = vpack.c.b16 %v164, %v163
    %v264 = vpack.c.b16 %v165, %v164
    %v265 = vpack.c.b16 %v166, %v165
    %v266 = vpack.c.b16 %v167, %v166
    %v267 = vpack.c.b16 %v168, %v167
    %v268 = vpack.c.b16 %v169, %v168
    %v269 = vpack.c.b16 %v170, %v169
    %v270 = vpack.c.b16 %v171, %v170
    %v271 = vpack.c.b16 %v172, %v171
    %v272 = vpack.c.b16 %v173, %v172
    %v273 = vpack.c.b16 %v174, %v173
    %v274 = vpack.c.b16 %v175, %v174
    %v275 = vpack.c.b16 %v176, %v175
    %v276 = vpack.c.b16 %v177, %v176
    %v277 = vpack.c.b16 %v178, %v177
    %v278 = vpack.c.b16 %v179, %v178
    %v378 = vunpack.c.l.b16 %v180
    %v379 = vunpack.c.l.b16 %v181
    %v380 = vunpack.c.l.b16 %v182
    %v381 = vunpack.c.l.b16 %v183
    %v382 = vunpack.c.l.b16 %v184
    %v383 = vunpack.c.l.b16 %v185
    %v384 = vunpack.c.l.b16 %v186
    %v385 = vunpack.c.l.b16 %v187
    %v386 = vunpack.c.l.b16 %v188
    %v387 = vunpack.c.l.b16 %v189
    %v388 = vunpack.c.l.b16 %v190
    %v389 = vunpack.c.l.b16 %v191
    %v390 = vunpack.c.l.b16 %v192
    %v391 = vunpack.c.l.b16 %v193
    %v392 = vunpack.c.l.b16 %v194
    %v393 = vunpack.c.l.b16 %v195
    %v394 = vunpack.c.l.b16 %v196
    %v395 = vunpack.c.l.b16 %v197
    %v396 = vunpack.c.l.b16 %v198
    %v397 = vunpack.c.l.b16 %v199
    %v398 = vunpack.c.l.b16 %v200
    %v399 = vunpack.c.l.b16 %v201
    %v400 = vunpack.c.l.b16 %v202
    %v401 = vunpack.c.l.b16 %v203
    %v402 = vunpack.c.l.b16 %v204
    %v403 = vunpack.c.l.b16 %v205
    %v404 = vunpack.c.l.b16 %v206
    %v405 = vunpack.c.l.b16 %v207
    %v406 = vunpack.c.l.b16 %v208
    %v407 = vunpack.c.l.b16 %v209
    %v408 = vunpack.c.l.b16 %v210
    %v409 = vunpack.c.l.b16 %v211
    %v410 = vunpack.c.l.b16 %v212
    %v411 = vunpack.c.l.b16 %v213
    %v412 = vunpack.c.l.b16 %v214
    %v413 = vunpack.c.l.b16 %v215
    %v414 = vunpack.c.l.b16 %v216
    %v415 = vunpack.c.l.b16 %v217
    %v416 = vunpack.c.l.b16 %v218
    %v417 = vunpack.c.l.b16 %v219
    %v418 = vunpack.c.l.b16 %v220
    %v419 = vunpack.c.l.b16 %v221
    %v420 = vunpack.c.l.b16 %v222
    %v421 = vunpack.c.l.b16 %v223
    %v422 = vunpack.c.l.b16 %v224
    %v423 = vunpack.c.l.b16 %v225
    %v424 = vunpack.c.l.b16 %v226
    %v425 = vunpack.c.l.b16 %v227
    %v426 = vunpack.c.l.b16 %v228
    %v427 = vunpack.c.l.b16 %v229
    %v428 = vunpack.c.l.b16 %v230
    %v429 = vunpack.c.l.b16 %v231
    %v430 = vunpack.c.l.b16 %v232
    %v431 = vunpack.c.l.b16 %v233
    %v432 = vunpack.c.l.b16 %v234
    %v433 = vunpack.c.l.b16 %v235
    %v434 = vunpack.c.l.b16 %v236
    %v435 = vunpack.c.l.b16 %v237
    %v436 = vunpack.c.l.b16 %v238
    %v437 = vunpack.c.l.b16 %v239
    %v438 = vunpack.c.l.b16 %v240
    %v439 = vunpack.c.l.b16 %v241
    %v440 = vunpack.c.l.b16 %v242
    %v441 = vunpack.c.l.b16 %v243
    %v442 = vunpack.c.l.b16 %v244
    %v443 = vunpack.c.l.b16 %v245
    %v444 = vunpack.c.l.b16 %v246
    %v445 = vunpack.c.l.b16 %v247
    %v446 = vunpack.c.l.b16 %v248
    %v447 = vunpack.c.l.b16 %v249
    %v448 = vunpack.c.l.b16 %v250
    %v449 = vunpack.c.l.b16 %v251
    %v450 = vunpack.c.l.b16 %v252
    %v451 = vunpack.c.l.b16 %v253
    %v452 = vunpack.c.l.b16 %v254
    %v453 = vunpack.c.l.b16 %v255
    %v454 = vunpack.c.l.b16 %v256
    %v455 = vunpack.c.l.b16 %v257
    %v456 = vunpack.c.l.b16 %v258
    %v457 = vunpack.c.l.b16 %v259
    %v458 = vpack.c.b16 %v379, %v378
    %v459 = vpack.c.b16 %v381, %v380
    %v460 = vpack.c.b16 %v383, %v382
    %v461 = vpack.c.b16 %v385, %v384
    %v462 = vpack.c.b16 %v387, %v386
    %v463 = vpack.c.b16 %v389, %v388
    %v464 = vpack.c.b16 %v391, %v390
    %v465 = vpack.c.b16 %v393, %v392
    %v466 = vpack.c.b16 %v395, %v394
    %v467 = vpack.c.b16 %v397, %v396
    %v468 = vpack.c.b16 %v399, %v398
    %v469 = vpack.c.b16 %v401, %v400
    %v470 = vpack.c.b16 %v403, %v402
    %v471 = vpack.c.b16 %v405, %v404
    %v472 = vpack.c.b16 %v407, %v406
    %v473 = vpack.c.b16 %v409, %v408
    %v474 = vpack.c.b16 %v411, %v410
    %v475 = vpack.c.b16 %v413, %v412
    %v476 = vpack.c.b16 %v415, %v414
    %v477 = vpack.c.b16 %v417, %v416
    %v478 = vpack.c.b16 %v419, %v418
    %v479 = vpack.c.b16 %v421, %v420
    %v480 = vpack.c.b16 %v423, %v422
    %v481 = vpack.c.b16 %v425, %v424
    %v482 = vpack.c.b16 %v427, %v426
    %v483 = vpack.c.b16 %v429, %v428
    %v484 = vpack.c.b16 %v431, %v430
    %v485 = vpack.c.b16 %v433, %v432
    %v486 = vpack.c.b16 %v435, %v434
    %v487 = vpack.c.b16 %v437, %v436
    %v488 = vpack.c.b16 %v439, %v438
    %v489 = vpack.c.b16 %v441, %v440
    %v490 = vpack.c.b16 %v443, %v442
    %v491 = vpack.c.b16 %v445, %v444
    %v492 = vpack.c.b16 %v447, %v446
    %v493 = vpack.c.b16 %v449, %v448
    %v494 = vpack.c.b16 %v451, %v450
    %v495 = vpack.c.b16 %v453, %v452
    %v496 = vpack.c.b16 %v455, %v454
    %v497 = vpack.c.b16 %v457, %v456
    %538 = vmatpush.bf16.msra.mxu0 %v465
    %539 = vmatpush.bf16.msra.mxu0 %v464
    %540 = vmatpush.bf16.msra.mxu0 %v463
    %541 = vmatpush.bf16.msra.mxu0 %v462
    %542 = vmatpush.bf16.msra.mxu0 %v461
    %543 = vmatpush.bf16.msra.mxu0 %v460
    %544 = vmatpush.bf16.msra.mxu0 %v459
    %545 = vmatpush.bf16.msra.mxu0 %v458
    %546 = vmatmul.bf16.gmra.mxu0 %v260
    %v547 = vpop.f32.mrf.mxu0
    %v548 = vadd.f32 0.0, %v547
    %v549 = vpop.f32.mrf.mxu0
    %v550 = vadd.f32 0.0, %v549
    %551 = vmatmul.bf16.gmra.mxu0 %v262
    %v552 = vpop.f32.mrf.mxu0
    %v553 = vadd.f32 0.0, %v552
    %v554 = vpop.f32.mrf.mxu0
    %v555 = vadd.f32 0.0, %v554
    %556 = vmatmul.bf16.gmra.mxu0 %v264
    %v557 = vpop.f32.mrf.mxu0
    %v558 = vadd.f32 0.0, %v557
    %v559 = vpop.f32.mrf.mxu0
    %v560 = vadd.f32 0.0, %v559
    %561 = vmatmul.bf16.gmra.mxu0 %v266
    %v562 = vpop.f32.mrf.mxu0
    %v563 = vadd.f32 0.0, %v562
    %v564 = vpop.f32.mrf.mxu0
    %v565 = vadd.f32 0.0, %v564
    %566 = vmatmul.bf16.gmra.mxu0 %v268
    %v567 = vpop.f32.mrf.mxu0
    %v568 = vadd.f32 0.0, %v567
    %v569 = vpop.f32.mrf.mxu0
    %v570 = vadd.f32 0.0, %v569
    %571 = vmatmul.bf16.gmra.mxu0 %v270
    %v572 = vpop.f32.mrf.mxu0
    %v573 = vadd.f32 0.0, %v572
    %v574 = vpop.f32.mrf.mxu0
    %v575 = vadd.f32 0.0, %v574
    %576 = vmatmul.bf16.gmra.mxu0 %v272
    %v577 = vpop.f32.mrf.mxu0
    %v578 = vadd.f32 0.0, %v577
    %v579 = vpop.f32.mrf.mxu0
    %v580 = vadd.f32 0.0, %v579
    %581 = vmatmul.bf16.gmra.mxu0 %v274
    %v582 = vpop.f32.mrf.mxu0
    %v583 = vadd.f32 0.0, %v582
    %v584 = vpop.f32.mrf.mxu0
    %v585 = vadd.f32 0.0, %v584
    %586 = vdwg.mxu0
    %587 = vmatpush.bf16.msra.mxu0 %v473
    %588 = vmatpush.bf16.msra.mxu0 %v472
    %589 = vmatpush.bf16.msra.mxu0 %v471
    %590 = vmatpush.bf16.msra.mxu0 %v470
    %591 = vmatpush.bf16.msra.mxu0 %v469
    %592 = vmatpush.bf16.msra.mxu0 %v468
    %593 = vmatpush.bf16.msra.mxu0 %v467
    %594 = vmatpush.bf16.msra.mxu0 %v466
    %595 = vmatmul.bf16.gmra.mxu0 %v261
    %v596 = vpop.f32.mrf.mxu0
    %v597 = vadd.f32 %v548, %v596
    %v598 = vpop.f32.mrf.mxu0
    %v599 = vadd.f32 %v550, %v598
    %600 = vmatmul.bf16.gmra.mxu0 %v263
    %v601 = vpop.f32.mrf.mxu0
    %v602 = vadd.f32 %v553, %v601
    %v603 = vpop.f32.mrf.mxu0
    %v604 = vadd.f32 %v555, %v603
    %605 = vmatmul.bf16.gmra.mxu0 %v265
    %v606 = vpop.f32.mrf.mxu0
    %v607 = vadd.f32 %v558, %v606
    %v608 = vpop.f32.mrf.mxu0
    %v609 = vadd.f32 %v560, %v608
    %610 = vmatmul.bf16.gmra.mxu0 %v267
    %v611 = vpop.f32.mrf.mxu0
    %v612 = vadd.f32 %v563, %v611
    %v613 = vpop.f32.mrf.mxu0
    %v614 = vadd.f32 %v565, %v613
    %615 = vmatmul.bf16.gmra.mxu0 %v269
    %v616 = vpop.f32.mrf.mxu0
    %v617 = vadd.f32 %v568, %v616
    %v618 = vpop.f32.mrf.mxu0
    %v619 = vadd.f32 %v570, %v618
    %620 = vmatmul.bf16.gmra.mxu0 %v271
    %v621 = vpop.f32.mrf.mxu0
    %v622 = vadd.f32 %v573, %v621
    %v623 = vpop.f32.mrf.mxu0
    %v624 = vadd.f32 %v575, %v623
    %625 = vmatmul.bf16.gmra.mxu0 %v273
    %v626 = vpop.f32.mrf.mxu0
    %v627 = vadd.f32 %v578, %v626
    %v628 = vpop.f32.mrf.mxu0
    %v629 = vadd.f32 %v580, %v628
    %630 = vmatmul.bf16.gmra.mxu0 %v275
    %v631 = vpop.f32.mrf.mxu0
    %v632 = vadd.f32 %v583, %v631
    %v633 = vpop.f32.mrf.mxu0
    %v634 = vadd.f32 %v585, %v633
    %635 = vdwg.mxu0
    %636 = vmatpush.bf16.msra.mxu0 %v481
    %637 = vmatpush.bf16.msra.mxu0 %v480
    %638 = vmatpush.bf16.msra.mxu0 %v479
    %639 = vmatpush.bf16.msra.mxu0 %v478
    %640 = vmatpush.bf16.msra.mxu0 %v477
    %641 = vmatpush.bf16.msra.mxu0 %v476
    %642 = vmatpush.bf16.msra.mxu0 %v475
    %643 = vmatpush.bf16.msra.mxu0 %v474
    %644 = vmatmul.bf16.gmra.mxu0 %v262
    %v645 = vpop.f32.mrf.mxu0
    %v646 = vadd.f32 %v597, %v645
    %v647 = vpop.f32.mrf.mxu0
    %v648 = vadd.f32 %v599, %v647
    %649 = vmatmul.bf16.gmra.mxu0 %v264
    %v650 = vpop.f32.mrf.mxu0
    %v651 = vadd.f32 %v602, %v650
    %v652 = vpop.f32.mrf.mxu0
    %v653 = vadd.f32 %v604, %v652
    %654 = vmatmul.bf16.gmra.mxu0 %v266
    %v655 = vpop.f32.mrf.mxu0
    %v656 = vadd.f32 %v607, %v655
    %v657 = vpop.f32.mrf.mxu0
    %v658 = vadd.f32 %v609, %v657
    %659 = vmatmul.bf16.gmra.mxu0 %v268
    %v660 = vpop.f32.mrf.mxu0
    %v661 = vadd.f32 %v612, %v660
    %v662 = vpop.f32.mrf.mxu0
    %v663 = vadd.f32 %v614, %v662
    %664 = vmatmul.bf16.gmra.mxu0 %v270
    %v665 = vpop.f32.mrf.mxu0
    %v666 = vadd.f32 %v617, %v665
    %v667 = vpop.f32.mrf.mxu0
    %v668 = vadd.f32 %v619, %v667
    %669 = vmatmul.bf16.gmra.mxu0 %v272
    %v670 = vpop.f32.mrf.mxu0
    %v671 = vadd.f32 %v622, %v670
    %v672 = vpop.f32.mrf.mxu0
    %v673 = vadd.f32 %v624, %v672
    %674 = vmatmul.bf16.gmra.mxu0 %v274
    %v675 = vpop.f32.mrf.mxu0
    %v676 = vadd.f32 %v627, %v675
    %v677 = vpop.f32.mrf.mxu0
    %v678 = vadd.f32 %v629, %v677
    %679 = vmatmul.bf16.gmra.mxu0 %v276
    %v680 = vpop.f32.mrf.mxu0
    %v681 = vadd.f32 %v632, %v680
    %v682 = vpop.f32.mrf.mxu0
    %v683 = vadd.f32 %v634, %v682
    %684 = vdwg.mxu0
    %685 = vmatpush.bf16.msra.mxu0 %v489
    %686 = vmatpush.bf16.msra.mxu0 %v488
    %687 = vmatpush.bf16.msra.mxu0 %v487
    %688 = vmatpush.bf16.msra.mxu0 %v486
    %689 = vmatpush.bf16.msra.mxu0 %v485
    %690 = vmatpush.bf16.msra.mxu0 %v484
    %691 = vmatpush.bf16.msra.mxu0 %v483
    %692 = vmatpush.bf16.msra.mxu0 %v482
    %693 = vmatmul.bf16.gmra.mxu0 %v263
    %v694 = vpop.f32.mrf.mxu0
    %v695 = vadd.f32 %v646, %v694
    %v696 = vpop.f32.mrf.mxu0
    %v697 = vadd.f32 %v648, %v696
    %698 = vmatmul.bf16.gmra.mxu0 %v265
    %v699 = vpop.f32.mrf.mxu0
    %v700 = vadd.f32 %v651, %v699
    %v701 = vpop.f32.mrf.mxu0
    %v702 = vadd.f32 %v653, %v701
    %703 = vmatmul.bf16.gmra.mxu0 %v267
    %v704 = vpop.f32.mrf.mxu0
    %v705 = vadd.f32 %v656, %v704
    %v706 = vpop.f32.mrf.mxu0
    %v707 = vadd.f32 %v658, %v706
    %708 = vmatmul.bf16.gmra.mxu0 %v269
    %v709 = vpop.f32.mrf.mxu0
    %v710 = vadd.f32 %v661, %v709
    %v711 = vpop.f32.mrf.mxu0
    %v712 = vadd.f32 %v663, %v711
    %713 = vmatmul.bf16.gmra.mxu0 %v271
    %v714 = vpop.f32.mrf.mxu0
    %v715 = vadd.f32 %v666, %v714
    %v716 = vpop.f32.mrf.mxu0
    %v717 = vadd.f32 %v668, %v716
    %718 = vmatmul.bf16.gmra.mxu0 %v273
    %v719 = vpop.f32.mrf.mxu0
    %v720 = vadd.f32 %v671, %v719
    %v721 = vpop.f32.mrf.mxu0
    %v722 = vadd.f32 %v673, %v721
    %723 = vmatmul.bf16.gmra.mxu0 %v275
    %v724 = vpop.f32.mrf.mxu0
    %v725 = vadd.f32 %v676, %v724
    %v726 = vpop.f32.mrf.mxu0
    %v727 = vadd.f32 %v678, %v726
    %728 = vmatmul.bf16.gmra.mxu0 %v277
    %v729 = vpop.f32.mrf.mxu0
    %v730 = vadd.f32 %v681, %v729
    %v731 = vpop.f32.mrf.mxu0
    %v732 = vadd.f32 %v683, %v731
    %733 = vdwg.mxu0
    %734 = vmatpush.bf16.msra.mxu0 %v497
    %735 = vmatpush.bf16.msra.mxu0 %v496
    %736 = vmatpush.bf16.msra.mxu0 %v495
    %737 = vmatpush.bf16.msra.mxu0 %v494
    %738 = vmatpush.bf16.msra.mxu0 %v493
    %739 = vmatpush.bf16.msra.mxu0 %v492
    %740 = vmatpush.bf16.msra.mxu0 %v491
    %741 = vmatpush.bf16.msra.mxu0 %v490
    %742 = vmatmul.bf16.gmra.mxu0 %v264
    %v743 = vpop.f32.mrf.mxu0
    %v744 = vadd.f32 %v695, %v743
    %v745 = vpop.f32.mrf.mxu0
    %v746 = vadd.f32 %v697, %v745
    %747 = vmatmul.bf16.gmra.mxu0 %v266
    %v748 = vpop.f32.mrf.mxu0
    %v749 = vadd.f32 %v700, %v748
    %v750 = vpop.f32.mrf.mxu0
    %v751 = vadd.f32 %v702, %v750
    %752 = vmatmul.bf16.gmra.mxu0 %v268
    %v753 = vpop.f32.mrf.mxu0
    %v754 = vadd.f32 %v705, %v753
    %v755 = vpop.f32.mrf.mxu0
    %v756 = vadd.f32 %v707, %v755
    %757 = vmatmul.bf16.gmra.mxu0 %v270
    %v758 = vpop.f32.mrf.mxu0
    %v759 = vadd.f32 %v710, %v758
    %v760 = vpop.f32.mrf.mxu0
    %v761 = vadd.f32 %v712, %v760
    %762 = vmatmul.bf16.gmra.mxu0 %v272
    %v763 = vpop.f32.mrf.mxu0
    %v764 = vadd.f32 %v715, %v763
    %v765 = vpop.f32.mrf.mxu0
    %v766 = vadd.f32 %v717, %v765
    %767 = vmatmul.bf16.gmra.mxu0 %v274
    %v768 = vpop.f32.mrf.mxu0
    %v769 = vadd.f32 %v720, %v768
    %v770 = vpop.f32.mrf.mxu0
    %v771 = vadd.f32 %v722, %v770
    %772 = vmatmul.bf16.gmra.mxu0 %v276
    %v773 = vpop.f32.mrf.mxu0
    %v774 = vadd.f32 %v725, %v773
    %v775 = vpop.f32.mrf.mxu0
    %v776 = vadd.f32 %v727, %v775
    %777 = vmatmul.bf16.gmra.mxu0 %v278
    %v778 = vpop.f32.mrf.mxu0
    %v779 = vadd.f32 %v730, %v778
    %v780 = vpop.f32.mrf.mxu0
    %v781 = vadd.f32 %v732, %v780
    %782 = vdwg.mxu0
    %v783 = vld [vmem:[#allocation8] sm:$0x1]
    %v785 = vperm.slane %v783, 0
    %v787 = vmul.f32 %v744, %v785
    %v788 = vmul.f32 %v746, %v785
    %v789 = vmul.f32 %v749, %v785
    %v790 = vmul.f32 %v751, %v785
    %v791 = vmul.f32 %v754, %v785
    %v792 = vmul.f32 %v756, %v785
    %v793 = vmul.f32 %v759, %v785
    %v794 = vmul.f32 %v761, %v785
    %v795 = vmul.f32 %v764, %v785
    %v796 = vmul.f32 %v766, %v785
    %v797 = vmul.f32 %v769, %v785
    %v798 = vmul.f32 %v771, %v785
    %v799 = vmul.f32 %v774, %v785
    %v800 = vmul.f32 %v776, %v785
    %v801 = vmul.f32 %v779, %v785
    %v802 = vmul.f32 %v781, %v785
    %v803 = vld [vmem:[#allocation9] sm:$0x1]
    %v805 = vperm.slane %v803, 0
    %v807 = vadd.f32 %v787, %v805
    %v808 = vadd.f32 %v788, %v805
    %v809 = vadd.f32 %v789, %v805
    %v810 = vadd.f32 %v790, %v805
    %v811 = vadd.f32 %v791, %v805
    %v812 = vadd.f32 %v792, %v805
    %v813 = vadd.f32 %v793, %v805
    %v814 = vadd.f32 %v794, %v805
    %v815 = vadd.f32 %v795, %v805
    %v816 = vadd.f32 %v796, %v805
    %v817 = vadd.f32 %v797, %v805
    %v818 = vadd.f32 %v798, %v805
    %v819 = vadd.f32 %v799, %v805
    %v820 = vadd.f32 %v800, %v805
    %v821 = vadd.f32 %v801, %v805
    %v822 = vadd.f32 %v802, %v805
    %v823 = vmax.f32 %v807, 0.0
    %v824 = vmax.f32 %v808, 0.0
    %v825 = vmax.f32 %v809, 0.0
    %v826 = vmax.f32 %v810, 0.0
    %v827 = vmax.f32 %v811, 0.0
    %v828 = vmax.f32 %v812, 0.0
    %v829 = vmax.f32 %v813, 0.0
    %v830 = vmax.f32 %v814, 0.0
    %v831 = vmax.f32 %v815, 0.0
    %v832 = vmax.f32 %v816, 0.0
    %v833 = vmax.f32 %v817, 0.0
    %v834 = vmax.f32 %v818, 0.0
    %v835 = vmax.f32 %v819, 0.0
    %v836 = vmax.f32 %v820, 0.0
    %v837 = vmax.f32 %v821, 0.0
    %v838 = vmax.f32 %v822, 0.0
    %v839 = vpack.c.bf16 %v823, %v823
    %v840 = vpack.c.bf16 %v824, %v824
    %v841 = vpack.c.bf16 %v825, %v825
    %v842 = vpack.c.bf16 %v826, %v826
    %v843 = vpack.c.bf16 %v827, %v827
    %v844 = vpack.c.bf16 %v828, %v828
    %v845 = vpack.c.bf16 %v829, %v829
    %v846 = vpack.c.bf16 %v830, %v830
    %v847 = vpack.c.bf16 %v831, %v831
    %v848 = vpack.c.bf16 %v832, %v832
    %v849 = vpack.c.bf16 %v833, %v833
    %v850 = vpack.c.bf16 %v834, %v834
    %v851 = vpack.c.bf16 %v835, %v835
    %v852 = vpack.c.bf16 %v836, %v836
    %v853 = vpack.c.bf16 %v837, %v837
    %v854 = vpack.c.bf16 %v838, %v838
    %855 = vst [vmem:[%s103] sm:$0xf] %v839
    %856 = vst [vmem:[%s103 + $0x4] sm:$0xf] %v840
    %857 = vst [vmem:[%s103 + $0x8] sm:$0xf] %v841
    %858 = vst [vmem:[%s103 + $0xc] sm:$0xf] %v842
    %859 = vst [vmem:[%s103 + $0x10] sm:$0xf] %v843
    %860 = vst [vmem:[%s103 + $0x14] sm:$0xf] %v844
    %861 = vst [vmem:[%s103 + $0x18] sm:$0xf] %v845
    %862 = vst [vmem:[%s103 + $0x1c] sm:$0xf] %v846
    %863 = vst [vmem:[%s103 + $0x20] sm:$0xf] %v847
    %864 = vst [vmem:[%s103 + $0x24] sm:$0xf] %v848
    %865 = vst [vmem:[%s103 + $0x28] sm:$0xf] %v849
    %866 = vst [vmem:[%s103 + $0x2c] sm:$0xf] %v850
    %867 = vst [vmem:[%s103 + $0x30] sm:$0xf] %v851
    %868 = vst [vmem:[%s103 + $0x34] sm:$0xf] %v852
    %869 = vst [vmem:[%s103 + $0x38] sm:$0xf] %v853
    %870 = vst [vmem:[%s103 + $0x3c] sm:$0xf] %v854
    %v871 = vld [vmem:[#allocation2] sm:$0xf]
    %v872 = vld [vmem:[#allocation2 + $0x4] sm:$0xf]
    %v873 = vld [vmem:[#allocation2 + $0x8] sm:$0xf]
    %v874 = vld [vmem:[#allocation2 + $0xc] sm:$0xf]
    %v875 = vld [vmem:[#allocation2 + $0x10] sm:$0xf]
    %v876 = vld [vmem:[#allocation2 + $0x14] sm:$0xf]
    %v877 = vld [vmem:[#allocation2 + $0x18] sm:$0xf]
    %v878 = vld [vmem:[#allocation2 + $0x1c] sm:$0xf]
    %v879 = vld [vmem:[#allocation2 + $0x20] sm:$0xf]
    %v880 = vld [vmem:[#allocation2 + $0x24] sm:$0xf]
    %v881 = vld [vmem:[#allocation2 + $0x28] sm:$0xf]
    %v882 = vld [vmem:[#allocation2 + $0x2c] sm:$0xf]
    %v883 = vld [vmem:[#allocation2 + $0x30] sm:$0xf]
    %v884 = vld [vmem:[#allocation2 + $0x34] sm:$0xf]
    %v885 = vld [vmem:[#allocation2 + $0x38] sm:$0xf]
    %v886 = vld [vmem:[#allocation2 + $0x3c] sm:$0xf]
    %v887 = vld [vmem:[#allocation2 + $0x40] sm:$0xf]
    %v888 = vld [vmem:[#allocation2 + $0x44] sm:$0xf]
    %v889 = vld [vmem:[#allocation2 + $0x48] sm:$0xf]
    %v890 = vld [vmem:[#allocation2 + $0x4c] sm:$0xf]
    %v911 = vunpack.c.l.b16 %v871
    %v912 = vunpack.c.l.b16 %v872
    %v913 = vunpack.c.l.b16 %v873
    %v914 = vunpack.c.l.b16 %v874
    %v915 = vunpack.c.l.b16 %v875
    %v916 = vunpack.c.l.b16 %v876
    %v917 = vunpack.c.l.b16 %v877
    %v918 = vunpack.c.l.b16 %v878
    %v919 = vunpack.c.l.b16 %v879
    %v920 = vunpack.c.l.b16 %v880
    %v921 = vunpack.c.l.b16 %v881
    %v922 = vunpack.c.l.b16 %v882
    %v923 = vunpack.c.l.b16 %v883
    %v924 = vunpack.c.l.b16 %v884
    %v925 = vunpack.c.l.b16 %v885
    %v926 = vunpack.c.l.b16 %v886
    %v927 = vunpack.c.l.b16 %v887
    %v928 = vunpack.c.l.b16 %v888
    %v929 = vunpack.c.l.b16 %v889
    %v930 = vunpack.c.l.b16 %v890
    %s931 = scalar_lea.vmem [#allocation6], 320
    %v932 = vld [vmem:[%s931] sm:$0xf]
    %v933 = vld [vmem:[%s931 + $0x4] sm:$0xf]
    %v934 = vld [vmem:[%s931 + $0x8] sm:$0xf]
    %v935 = vld [vmem:[%s931 + $0xc] sm:$0xf]
    %v936 = vld [vmem:[%s931 + $0x10] sm:$0xf]
    %v937 = vld [vmem:[%s931 + $0x14] sm:$0xf]
    %v938 = vld [vmem:[%s931 + $0x18] sm:$0xf]
    %v939 = vld [vmem:[%s931 + $0x1c] sm:$0xf]
    %v940 = vld [vmem:[%s931 + $0x20] sm:$0xf]
    %v941 = vld [vmem:[%s931 + $0x24] sm:$0xf]
    %v942 = vld [vmem:[%s931 + $0x28] sm:$0xf]
    %v943 = vld [vmem:[%s931 + $0x2c] sm:$0xf]
    %v944 = vld [vmem:[%s931 + $0x30] sm:$0xf]
    %v945 = vld [vmem:[%s931 + $0x34] sm:$0xf]
    %v946 = vld [vmem:[%s931 + $0x38] sm:$0xf]
    %v947 = vld [vmem:[%s931 + $0x3c] sm:$0xf]
    %v948 = vld [vmem:[%s931 + $0x40] sm:$0xf]
    %v949 = vld [vmem:[%s931 + $0x44] sm:$0xf]
    %v950 = vld [vmem:[%s931 + $0x48] sm:$0xf]
    %v951 = vld [vmem:[%s931 + $0x4c] sm:$0xf]
    %v952 = vld [vmem:[%s931 + $0x50] sm:$0xf]
    %v953 = vld [vmem:[%s931 + $0x54] sm:$0xf]
    %v954 = vld [vmem:[%s931 + $0x58] sm:$0xf]
    %v955 = vld [vmem:[%s931 + $0x5c] sm:$0xf]
    %v956 = vld [vmem:[%s931 + $0x60] sm:$0xf]
    %v957 = vld [vmem:[%s931 + $0x64] sm:$0xf]
    %v958 = vld [vmem:[%s931 + $0x68] sm:$0xf]
    %v959 = vld [vmem:[%s931 + $0x6c] sm:$0xf]
    %v960 = vld [vmem:[%s931 + $0x70] sm:$0xf]
    %v961 = vld [vmem:[%s931 + $0x74] sm:$0xf]
    %v962 = vld [vmem:[%s931 + $0x78] sm:$0xf]
    %v963 = vld [vmem:[%s931 + $0x7c] sm:$0xf]
    %v964 = vld [vmem:[%s931 + $0x80] sm:$0xf]
    %v965 = vld [vmem:[%s931 + $0x84] sm:$0xf]
    %v966 = vld [vmem:[%s931 + $0x88] sm:$0xf]
    %v967 = vld [vmem:[%s931 + $0x8c] sm:$0xf]
    %v968 = vld [vmem:[%s931 + $0x90] sm:$0xf]
    %v969 = vld [vmem:[%s931 + $0x94] sm:$0xf]
    %v970 = vld [vmem:[%s931 + $0x98] sm:$0xf]
    %v971 = vld [vmem:[%s931 + $0x9c] sm:$0xf]
    %v972 = vld [vmem:[%s931 + $0xa0] sm:$0xf]
    %v973 = vld [vmem:[%s931 + $0xa4] sm:$0xf]
    %v974 = vld [vmem:[%s931 + $0xa8] sm:$0xf]
    %v975 = vld [vmem:[%s931 + $0xac] sm:$0xf]
    %v976 = vld [vmem:[%s931 + $0xb0] sm:$0xf]
    %v977 = vld [vmem:[%s931 + $0xb4] sm:$0xf]
    %v978 = vld [vmem:[%s931 + $0xb8] sm:$0xf]
    %v979 = vld [vmem:[%s931 + $0xbc] sm:$0xf]
    %v980 = vld [vmem:[%s931 + $0xc0] sm:$0xf]
    %v981 = vld [vmem:[%s931 + $0xc4] sm:$0xf]
    %v982 = vld [vmem:[%s931 + $0xc8] sm:$0xf]
    %v983 = vld [vmem:[%s931 + $0xcc] sm:$0xf]
    %v984 = vld [vmem:[%s931 + $0xd0] sm:$0xf]
    %v985 = vld [vmem:[%s931 + $0xd4] sm:$0xf]
    %v986 = vld [vmem:[%s931 + $0xd8] sm:$0xf]
    %v987 = vld [vmem:[%s931 + $0xdc] sm:$0xf]
    %v988 = vld [vmem:[%s931 + $0xe0] sm:$0xf]
    %v989 = vld [vmem:[%s931 + $0xe4] sm:$0xf]
    %v990 = vld [vmem:[%s931 + $0xe8] sm:$0xf]
    %v991 = vld [vmem:[%s931 + $0xec] sm:$0xf]
    %v992 = vld [vmem:[%s931 + $0xf0] sm:$0xf]
    %v993 = vld [vmem:[%s931 + $0xf4] sm:$0xf]
    %v994 = vld [vmem:[%s931 + $0xf8] sm:$0xf]
    %v995 = vld [vmem:[%s931 + $0xfc] sm:$0xf]
    %v996 = vld [vmem:[%s931 + $0x100] sm:$0xf]
    %v997 = vld [vmem:[%s931 + $0x104] sm:$0xf]
    %v998 = vld [vmem:[%s931 + $0x108] sm:$0xf]
    %v999 = vld [vmem:[%s931 + $0x10c] sm:$0xf]
    %v1000 = vld [vmem:[%s931 + $0x110] sm:$0xf]
    %v1001 = vld [vmem:[%s931 + $0x114] sm:$0xf]
    %v1002 = vld [vmem:[%s931 + $0x118] sm:$0xf]
    %v1003 = vld [vmem:[%s931 + $0x11c] sm:$0xf]
    %v1004 = vld [vmem:[%s931 + $0x120] sm:$0xf]
    %v1005 = vld [vmem:[%s931 + $0x124] sm:$0xf]
    %v1006 = vld [vmem:[%s931 + $0x128] sm:$0xf]
    %v1007 = vld [vmem:[%s931 + $0x12c] sm:$0xf]
    %v1008 = vld [vmem:[%s931 + $0x130] sm:$0xf]
    %v1009 = vld [vmem:[%s931 + $0x134] sm:$0xf]
    %v1010 = vld [vmem:[%s931 + $0x138] sm:$0xf]
    %v1011 = vld [vmem:[%s931 + $0x13c] sm:$0xf]
    %v1012 = vpack.c.b16 %v912, %v911
    %v1013 = vpack.c.b16 %v913, %v912
    %v1014 = vpack.c.b16 %v914, %v913
    %v1015 = vpack.c.b16 %v915, %v914
    %v1016 = vpack.c.b16 %v916, %v915
    %v1017 = vpack.c.b16 %v917, %v916
    %v1018 = vpack.c.b16 %v918, %v917
    %v1019 = vpack.c.b16 %v919, %v918
    %v1020 = vpack.c.b16 %v920, %v919
    %v1021 = vpack.c.b16 %v921, %v920
    %v1022 = vpack.c.b16 %v922, %v921
    %v1023 = vpack.c.b16 %v923, %v922
    %v1024 = vpack.c.b16 %v924, %v923
    %v1025 = vpack.c.b16 %v925, %v924
    %v1026 = vpack.c.b16 %v926, %v925
    %v1027 = vpack.c.b16 %v927, %v926
    %v1028 = vpack.c.b16 %v928, %v927
    %v1029 = vpack.c.b16 %v929, %v928
    %v1030 = vpack.c.b16 %v930, %v929
    %v1130 = vunpack.c.l.b16 %v932
    %v1131 = vunpack.c.l.b16 %v933
    %v1132 = vunpack.c.l.b16 %v934
    %v1133 = vunpack.c.l.b16 %v935
    %v1134 = vunpack.c.l.b16 %v936
    %v1135 = vunpack.c.l.b16 %v937
    %v1136 = vunpack.c.l.b16 %v938
    %v1137 = vunpack.c.l.b16 %v939
    %v1138 = vunpack.c.l.b16 %v940
    %v1139 = vunpack.c.l.b16 %v941
    %v1140 = vunpack.c.l.b16 %v942
    %v1141 = vunpack.c.l.b16 %v943
    %v1142 = vunpack.c.l.b16 %v944
    %v1143 = vunpack.c.l.b16 %v945
    %v1144 = vunpack.c.l.b16 %v946
    %v1145 = vunpack.c.l.b16 %v947
    %v1146 = vunpack.c.l.b16 %v948
    %v1147 = vunpack.c.l.b16 %v949
    %v1148 = vunpack.c.l.b16 %v950
    %v1149 = vunpack.c.l.b16 %v951
    %v1150 = vunpack.c.l.b16 %v952
    %v1151 = vunpack.c.l.b16 %v953
    %v1152 = vunpack.c.l.b16 %v954
    %v1153 = vunpack.c.l.b16 %v955
    %v1154 = vunpack.c.l.b16 %v956
    %v1155 = vunpack.c.l.b16 %v957
    %v1156 = vunpack.c.l.b16 %v958
    %v1157 = vunpack.c.l.b16 %v959
    %v1158 = vunpack.c.l.b16 %v960
    %v1159 = vunpack.c.l.b16 %v961
    %v1160 = vunpack.c.l.b16 %v962
    %v1161 = vunpack.c.l.b16 %v963
    %v1162 = vunpack.c.l.b16 %v964
    %v1163 = vunpack.c.l.b16 %v965
    %v1164 = vunpack.c.l.b16 %v966
    %v1165 = vunpack.c.l.b16 %v967
    %v1166 = vunpack.c.l.b16 %v968
    %v1167 = vunpack.c.l.b16 %v969
    %v1168 = vunpack.c.l.b16 %v970
    %v1169 = vunpack.c.l.b16 %v971
    %v1170 = vunpack.c.l.b16 %v972
    %v1171 = vunpack.c.l.b16 %v973
    %v1172 = vunpack.c.l.b16 %v974
    %v1173 = vunpack.c.l.b16 %v975
    %v1174 = vunpack.c.l.b16 %v976
    %v1175 = vunpack.c.l.b16 %v977
    %v1176 = vunpack.c.l.b16 %v978
    %v1177 = vunpack.c.l.b16 %v979
    %v1178 = vunpack.c.l.b16 %v980
    %v1179 = vunpack.c.l.b16 %v981
    %v1180 = vunpack.c.l.b16 %v982
    %v1181 = vunpack.c.l.b16 %v983
    %v1182 = vunpack.c.l.b16 %v984
    %v1183 = vunpack.c.l.b16 %v985
    %v1184 = vunpack.c.l.b16 %v986
    %v1185 = vunpack.c.l.b16 %v987
    %v1186 = vunpack.c.l.b16 %v988
    %v1187 = vunpack.c.l.b16 %v989
    %v1188 = vunpack.c.l.b16 %v990
    %v1189 = vunpack.c.l.b16 %v991
    %v1190 = vunpack.c.l.b16 %v992
    %v1191 = vunpack.c.l.b16 %v993
    %v1192 = vunpack.c.l.b16 %v994
    %v1193 = vunpack.c.l.b16 %v995
    %v1194 = vunpack.c.l.b16 %v996
    %v1195 = vunpack.c.l.b16 %v997
    %v1196 = vunpack.c.l.b16 %v998
    %v1197 = vunpack.c.l.b16 %v999
    %v1198 = vunpack.c.l.b16 %v1000
    %v1199 = vunpack.c.l.b16 %v1001
    %v1200 = vunpack.c.l.b16 %v1002
    %v1201 = vunpack.c.l.b16 %v1003
    %v1202 = vunpack.c.l.b16 %v1004
    %v1203 = vunpack.c.l.b16 %v1005
    %v1204 = vunpack.c.l.b16 %v1006
    %v1205 = vunpack.c.l.b16 %v1007
    %v1206 = vunpack.c.l.b16 %v1008
    %v1207 = vunpack.c.l.b16 %v1009
    %v1208 = vunpack.c.l.b16 %v1010
    %v1209 = vunpack.c.l.b16 %v1011
    %v1210 = vpack.c.b16 %v1131, %v1130
    %v1211 = vpack.c.b16 %v1133, %v1132
    %v1212 = vpack.c.b16 %v1135, %v1134
    %v1213 = vpack.c.b16 %v1137, %v1136
    %v1214 = vpack.c.b16 %v1139, %v1138
    %v1215 = vpack.c.b16 %v1141, %v1140
    %v1216 = vpack.c.b16 %v1143, %v1142
    %v1217 = vpack.c.b16 %v1145, %v1144
    %v1218 = vpack.c.b16 %v1147, %v1146
    %v1219 = vpack.c.b16 %v1149, %v1148
    %v1220 = vpack.c.b16 %v1151, %v1150
    %v1221 = vpack.c.b16 %v1153, %v1152
    %v1222 = vpack.c.b16 %v1155, %v1154
    %v1223 = vpack.c.b16 %v1157, %v1156
    %v1224 = vpack.c.b16 %v1159, %v1158
    %v1225 = vpack.c.b16 %v1161, %v1160
    %v1226 = vpack.c.b16 %v1163, %v1162
    %v1227 = vpack.c.b16 %v1165, %v1164
    %v1228 = vpack.c.b16 %v1167, %v1166
    %v1229 = vpack.c.b16 %v1169, %v1168
    %v1230 = vpack.c.b16 %v1171, %v1170
    %v1231 = vpack.c.b16 %v1173, %v1172
    %v1232 = vpack.c.b16 %v1175, %v1174
    %v1233 = vpack.c.b16 %v1177, %v1176
    %v1234 = vpack.c.b16 %v1179, %v1178
    %v1235 = vpack.c.b16 %v1181, %v1180
    %v1236 = vpack.c.b16 %v1183, %v1182
    %v1237 = vpack.c.b16 %v1185, %v1184
    %v1238 = vpack.c.b16 %v1187, %v1186
    %v1239 = vpack.c.b16 %v1189, %v1188
    %v1240 = vpack.c.b16 %v1191, %v1190
    %v1241 = vpack.c.b16 %v1193, %v1192
    %v1242 = vpack.c.b16 %v1195, %v1194
    %v1243 = vpack.c.b16 %v1197, %v1196
    %v1244 = vpack.c.b16 %v1199, %v1198
    %v1245 = vpack.c.b16 %v1201, %v1200
    %v1246 = vpack.c.b16 %v1203, %v1202
    %v1247 = vpack.c.b16 %v1205, %v1204
    %v1248 = vpack.c.b16 %v1207, %v1206
    %v1249 = vpack.c.b16 %v1209, %v1208
    %1290 = vmatpush.bf16.msra.mxu0 %v1217
    %1291 = vmatpush.bf16.msra.mxu0 %v1216
    %1292 = vmatpush.bf16.msra.mxu0 %v1215
    %1293 = vmatpush.bf16.msra.mxu0 %v1214
    %1294 = vmatpush.bf16.msra.mxu0 %v1213
    %1295 = vmatpush.bf16.msra.mxu0 %v1212
    %1296 = vmatpush.bf16.msra.mxu0 %v1211
    %1297 = vmatpush.bf16.msra.mxu0 %v1210
    %1298 = vmatmul.bf16.gmra.mxu0 %v1012
    %v1299 = vpop.f32.mrf.mxu0
    %v1300 = vadd.f32 0.0, %v1299
    %v1301 = vpop.f32.mrf.mxu0
    %v1302 = vadd.f32 0.0, %v1301
    %1303 = vmatmul.bf16.gmra.mxu0 %v1014
    %v1304 = vpop.f32.mrf.mxu0
    %v1305 = vadd.f32 0.0, %v1304
    %v1306 = vpop.f32.mrf.mxu0
    %v1307 = vadd.f32 0.0, %v1306
    %1308 = vmatmul.bf16.gmra.mxu0 %v1016
    %v1309 = vpop.f32.mrf.mxu0
    %v1310 = vadd.f32 0.0, %v1309
    %v1311 = vpop.f32.mrf.mxu0
    %v1312 = vadd.f32 0.0, %v1311
    %1313 = vmatmul.bf16.gmra.mxu0 %v1018
    %v1314 = vpop.f32.mrf.mxu0
    %v1315 = vadd.f32 0.0, %v1314
    %v1316 = vpop.f32.mrf.mxu0
    %v1317 = vadd.f32 0.0, %v1316
    %1318 = vmatmul.bf16.gmra.mxu0 %v1020
    %v1319 = vpop.f32.mrf.mxu0
    %v1320 = vadd.f32 0.0, %v1319
    %v1321 = vpop.f32.mrf.mxu0
    %v1322 = vadd.f32 0.0, %v1321
    %1323 = vmatmul.bf16.gmra.mxu0 %v1022
    %v1324 = vpop.f32.mrf.mxu0
    %v1325 = vadd.f32 0.0, %v1324
    %v1326 = vpop.f32.mrf.mxu0
    %v1327 = vadd.f32 0.0, %v1326
    %1328 = vmatmul.bf16.gmra.mxu0 %v1024
    %v1329 = vpop.f32.mrf.mxu0
    %v1330 = vadd.f32 0.0, %v1329
    %v1331 = vpop.f32.mrf.mxu0
    %v1332 = vadd.f32 0.0, %v1331
    %1333 = vmatmul.bf16.gmra.mxu0 %v1026
    %v1334 = vpop.f32.mrf.mxu0
    %v1335 = vadd.f32 0.0, %v1334
    %v1336 = vpop.f32.mrf.mxu0
    %v1337 = vadd.f32 0.0, %v1336
    %1338 = vdwg.mxu0
    %1339 = vmatpush.bf16.msra.mxu0 %v1225
    %1340 = vmatpush.bf16.msra.mxu0 %v1224
    %1341 = vmatpush.bf16.msra.mxu0 %v1223
    %1342 = vmatpush.bf16.msra.mxu0 %v1222
    %1343 = vmatpush.bf16.msra.mxu0 %v1221
    %1344 = vmatpush.bf16.msra.mxu0 %v1220
    %1345 = vmatpush.bf16.msra.mxu0 %v1219
    %1346 = vmatpush.bf16.msra.mxu0 %v1218
    %1347 = vmatmul.bf16.gmra.mxu0 %v1013
    %v1348 = vpop.f32.mrf.mxu0
    %v1349 = vadd.f32 %v1300, %v1348
    %v1350 = vpop.f32.mrf.mxu0
    %v1351 = vadd.f32 %v1302, %v1350
    %1352 = vmatmul.bf16.gmra.mxu0 %v1015
    %v1353 = vpop.f32.mrf.mxu0
    %v1354 = vadd.f32 %v1305, %v1353
    %v1355 = vpop.f32.mrf.mxu0
    %v1356 = vadd.f32 %v1307, %v1355
    %1357 = vmatmul.bf16.gmra.mxu0 %v1017
    %v1358 = vpop.f32.mrf.mxu0
    %v1359 = vadd.f32 %v1310, %v1358
    %v1360 = vpop.f32.mrf.mxu0
    %v1361 = vadd.f32 %v1312, %v1360
    %1362 = vmatmul.bf16.gmra.mxu0 %v1019
    %v1363 = vpop.f32.mrf.mxu0
    %v1364 = vadd.f32 %v1315, %v1363
    %v1365 = vpop.f32.mrf.mxu0
    %v1366 = vadd.f32 %v1317, %v1365
    %1367 = vmatmul.bf16.gmra.mxu0 %v1021
    %v1368 = vpop.f32.mrf.mxu0
    %v1369 = vadd.f32 %v1320, %v1368
    %v1370 = vpop.f32.mrf.mxu0
    %v1371 = vadd.f32 %v1322, %v1370
    %1372 = vmatmul.bf16.gmra.mxu0 %v1023
    %v1373 = vpop.f32.mrf.mxu0
    %v1374 = vadd.f32 %v1325, %v1373
    %v1375 = vpop.f32.mrf.mxu0
    %v1376 = vadd.f32 %v1327, %v1375
    %1377 = vmatmul.bf16.gmra.mxu0 %v1025
    %v1378 = vpop.f32.mrf.mxu0
    %v1379 = vadd.f32 %v1330, %v1378
    %v1380 = vpop.f32.mrf.mxu0
    %v1381 = vadd.f32 %v1332, %v1380
    %1382 = vmatmul.bf16.gmra.mxu0 %v1027
    %v1383 = vpop.f32.mrf.mxu0
    %v1384 = vadd.f32 %v1335, %v1383
    %v1385 = vpop.f32.mrf.mxu0
    %v1386 = vadd.f32 %v1337, %v1385
    %1387 = vdwg.mxu0
    %1388 = vmatpush.bf16.msra.mxu0 %v1233
    %1389 = vmatpush.bf16.msra.mxu0 %v1232
    %1390 = vmatpush.bf16.msra.mxu0 %v1231
    %1391 = vmatpush.bf16.msra.mxu0 %v1230
    %1392 = vmatpush.bf16.msra.mxu0 %v1229
    %1393 = vmatpush.bf16.msra.mxu0 %v1228
    %1394 = vmatpush.bf16.msra.mxu0 %v1227
    %1395 = vmatpush.bf16.msra.mxu0 %v1226
    %1396 = vmatmul.bf16.gmra.mxu0 %v1014
    %v1397 = vpop.f32.mrf.mxu0
    %v1398 = vadd.f32 %v1349, %v1397
    %v1399 = vpop.f32.mrf.mxu0
    %v1400 = vadd.f32 %v1351, %v1399
    %1401 = vmatmul.bf16.gmra.mxu0 %v1016
    %v1402 = vpop.f32.mrf.mxu0
    %v1403 = vadd.f32 %v1354, %v1402
    %v1404 = vpop.f32.mrf.mxu0
    %v1405 = vadd.f32 %v1356, %v1404
    %1406 = vmatmul.bf16.gmra.mxu0 %v1018
    %v1407 = vpop.f32.mrf.mxu0
    %v1408 = vadd.f32 %v1359, %v1407
    %v1409 = vpop.f32.mrf.mxu0
    %v1410 = vadd.f32 %v1361, %v1409
    %1411 = vmatmul.bf16.gmra.mxu0 %v1020
    %v1412 = vpop.f32.mrf.mxu0
    %v1413 = vadd.f32 %v1364, %v1412
    %v1414 = vpop.f32.mrf.mxu0
    %v1415 = vadd.f32 %v1366, %v1414
    %1416 = vmatmul.bf16.gmra.mxu0 %v1022
    %v1417 = vpop.f32.mrf.mxu0
    %v1418 = vadd.f32 %v1369, %v1417
    %v1419 = vpop.f32.mrf.mxu0
    %v1420 = vadd.f32 %v1371, %v1419
    %1421 = vmatmul.bf16.gmra.mxu0 %v1024
    %v1422 = vpop.f32.mrf.mxu0
    %v1423 = vadd.f32 %v1374, %v1422
    %v1424 = vpop.f32.mrf.mxu0
    %v1425 = vadd.f32 %v1376, %v1424
    %1426 = vmatmul.bf16.gmra.mxu0 %v1026
    %v1427 = vpop.f32.mrf.mxu0
    %v1428 = vadd.f32 %v1379, %v1427
    %v1429 = vpop.f32.mrf.mxu0
    %v1430 = vadd.f32 %v1381, %v1429
    %1431 = vmatmul.bf16.gmra.mxu0 %v1028
    %v1432 = vpop.f32.mrf.mxu0
    %v1433 = vadd.f32 %v1384, %v1432
    %v1434 = vpop.f32.mrf.mxu0
    %v1435 = vadd.f32 %v1386, %v1434
    %1436 = vdwg.mxu0
    %1437 = vmatpush.bf16.msra.mxu0 %v1241
    %1438 = vmatpush.bf16.msra.mxu0 %v1240
    %1439 = vmatpush.bf16.msra.mxu0 %v1239
    %1440 = vmatpush.bf16.msra.mxu0 %v1238
    %1441 = vmatpush.bf16.msra.mxu0 %v1237
    %1442 = vmatpush.bf16.msra.mxu0 %v1236
    %1443 = vmatpush.bf16.msra.mxu0 %v1235
    %1444 = vmatpush.bf16.msra.mxu0 %v1234
    %1445 = vmatmul.bf16.gmra.mxu0 %v1015
    %v1446 = vpop.f32.mrf.mxu0
    %v1447 = vadd.f32 %v1398, %v1446
    %v1448 = vpop.f32.mrf.mxu0
    %v1449 = vadd.f32 %v1400, %v1448
    %1450 = vmatmul.bf16.gmra.mxu0 %v1017
    %v1451 = vpop.f32.mrf.mxu0
    %v1452 = vadd.f32 %v1403, %v1451
    %v1453 = vpop.f32.mrf.mxu0
    %v1454 = vadd.f32 %v1405, %v1453
    %1455 = vmatmul.bf16.gmra.mxu0 %v1019
    %v1456 = vpop.f32.mrf.mxu0
    %v1457 = vadd.f32 %v1408, %v1456
    %v1458 = vpop.f32.mrf.mxu0
    %v1459 = vadd.f32 %v1410, %v1458
    %1460 = vmatmul.bf16.gmra.mxu0 %v1021
    %v1461 = vpop.f32.mrf.mxu0
    %v1462 = vadd.f32 %v1413, %v1461
    %v1463 = vpop.f32.mrf.mxu0
    %v1464 = vadd.f32 %v1415, %v1463
    %1465 = vmatmul.bf16.gmra.mxu0 %v1023
    %v1466 = vpop.f32.mrf.mxu0
    %v1467 = vadd.f32 %v1418, %v1466
    %v1468 = vpop.f32.mrf.mxu0
    %v1469 = vadd.f32 %v1420, %v1468
    %1470 = vmatmul.bf16.gmra.mxu0 %v1025
    %v1471 = vpop.f32.mrf.mxu0
    %v1472 = vadd.f32 %v1423, %v1471
    %v1473 = vpop.f32.mrf.mxu0
    %v1474 = vadd.f32 %v1425, %v1473
    %1475 = vmatmul.bf16.gmra.mxu0 %v1027
    %v1476 = vpop.f32.mrf.mxu0
    %v1477 = vadd.f32 %v1428, %v1476
    %v1478 = vpop.f32.mrf.mxu0
    %v1479 = vadd.f32 %v1430, %v1478
    %1480 = vmatmul.bf16.gmra.mxu0 %v1029
    %v1481 = vpop.f32.mrf.mxu0
    %v1482 = vadd.f32 %v1433, %v1481
    %v1483 = vpop.f32.mrf.mxu0
    %v1484 = vadd.f32 %v1435, %v1483
    %1485 = vdwg.mxu0
    %1486 = vmatpush.bf16.msra.mxu0 %v1249
    %1487 = vmatpush.bf16.msra.mxu0 %v1248
    %1488 = vmatpush.bf16.msra.mxu0 %v1247
    %1489 = vmatpush.bf16.msra.mxu0 %v1246
    %1490 = vmatpush.bf16.msra.mxu0 %v1245
    %1491 = vmatpush.bf16.msra.mxu0 %v1244
    %1492 = vmatpush.bf16.msra.mxu0 %v1243
    %1493 = vmatpush.bf16.msra.mxu0 %v1242
    %1494 = vmatmul.bf16.gmra.mxu0 %v1016
    %v1495 = vpop.f32.mrf.mxu0
    %v1496 = vadd.f32 %v1447, %v1495
    %v1497 = vpop.f32.mrf.mxu0
    %v1498 = vadd.f32 %v1449, %v1497
    %1499 = vmatmul.bf16.gmra.mxu0 %v1018
    %v1500 = vpop.f32.mrf.mxu0
    %v1501 = vadd.f32 %v1452, %v1500
    %v1502 = vpop.f32.mrf.mxu0
    %v1503 = vadd.f32 %v1454, %v1502
    %1504 = vmatmul.bf16.gmra.mxu0 %v1020
    %v1505 = vpop.f32.mrf.mxu0
    %v1506 = vadd.f32 %v1457, %v1505
    %v1507 = vpop.f32.mrf.mxu0
    %v1508 = vadd.f32 %v1459, %v1507
    %1509 = vmatmul.bf16.gmra.mxu0 %v1022
    %v1510 = vpop.f32.mrf.mxu0
    %v1511 = vadd.f32 %v1462, %v1510
    %v1512 = vpop.f32.mrf.mxu0
    %v1513 = vadd.f32 %v1464, %v1512
    %1514 = vmatmul.bf16.gmra.mxu0 %v1024
    %v1515 = vpop.f32.mrf.mxu0
    %v1516 = vadd.f32 %v1467, %v1515
    %v1517 = vpop.f32.mrf.mxu0
    %v1518 = vadd.f32 %v1469, %v1517
    %1519 = vmatmul.bf16.gmra.mxu0 %v1026
    %v1520 = vpop.f32.mrf.mxu0
    %v1521 = vadd.f32 %v1472, %v1520
    %v1522 = vpop.f32.mrf.mxu0
    %v1523 = vadd.f32 %v1474, %v1522
    %1524 = vmatmul.bf16.gmra.mxu0 %v1028
    %v1525 = vpop.f32.mrf.mxu0
    %v1526 = vadd.f32 %v1477, %v1525
    %v1527 = vpop.f32.mrf.mxu0
    %v1528 = vadd.f32 %v1479, %v1527
    %1529 = vmatmul.bf16.gmra.mxu0 %v1030
    %v1530 = vpop.f32.mrf.mxu0
    %v1531 = vadd.f32 %v1482, %v1530
    %v1532 = vpop.f32.mrf.mxu0
    %v1533 = vadd.f32 %v1484, %v1532
    %1534 = vdwg.mxu0
    %s1535 = scalar_lea.vmem [#allocation8], 1
    %v1536 = vld [vmem:[%s1535] sm:$0x1]
    %v1538 = vperm.slane %v1536, 0
    %v1540 = vmul.f32 %v1496, %v1538
    %v1541 = vmul.f32 %v1498, %v1538
    %v1542 = vmul.f32 %v1501, %v1538
    %v1543 = vmul.f32 %v1503, %v1538
    %v1544 = vmul.f32 %v1506, %v1538
    %v1545 = vmul.f32 %v1508, %v1538
    %v1546 = vmul.f32 %v1511, %v1538
    %v1547 = vmul.f32 %v1513, %v1538
    %v1548 = vmul.f32 %v1516, %v1538
    %v1549 = vmul.f32 %v1518, %v1538
    %v1550 = vmul.f32 %v1521, %v1538
    %v1551 = vmul.f32 %v1523, %v1538
    %v1552 = vmul.f32 %v1526, %v1538
    %v1553 = vmul.f32 %v1528, %v1538
    %v1554 = vmul.f32 %v1531, %v1538
    %v1555 = vmul.f32 %v1533, %v1538
    %s1556 = scalar_lea.vmem [#allocation9], 1
    %v1557 = vld [vmem:[%s1556] sm:$0x1]
    %v1559 = vperm.slane %v1557, 0
    %v1561 = vadd.f32 %v1540, %v1559
    %v1562 = vadd.f32 %v1541, %v1559
    %v1563 = vadd.f32 %v1542, %v1559
    %v1564 = vadd.f32 %v1543, %v1559
    %v1565 = vadd.f32 %v1544, %v1559
    %v1566 = vadd.f32 %v1545, %v1559
    %v1567 = vadd.f32 %v1546, %v1559
    %v1568 = vadd.f32 %v1547, %v1559
    %v1569 = vadd.f32 %v1548, %v1559
    %v1570 = vadd.f32 %v1549, %v1559
    %v1571 = vadd.f32 %v1550, %v1559
    %v1572 = vadd.f32 %v1551, %v1559
    %v1573 = vadd.f32 %v1552, %v1559
    %v1574 = vadd.f32 %v1553, %v1559
    %v1575 = vadd.f32 %v1554, %v1559
    %v1576 = vadd.f32 %v1555, %v1559
    %v1577 = vmax.f32 %v1561, 0.0
    %v1578 = vmax.f32 %v1562, 0.0
    %v1579 = vmax.f32 %v1563, 0.0
    %v1580 = vmax.f32 %v1564, 0.0
    %v1581 = vmax.f32 %v1565, 0.0
    %v1582 = vmax.f32 %v1566, 0.0
    %v1583 = vmax.f32 %v1567, 0.0
    %v1584 = vmax.f32 %v1568, 0.0
    %v1585 = vmax.f32 %v1569, 0.0
    %v1586 = vmax.f32 %v1570, 0.0
    %v1587 = vmax.f32 %v1571, 0.0
    %v1588 = vmax.f32 %v1572, 0.0
    %v1589 = vmax.f32 %v1573, 0.0
    %v1590 = vmax.f32 %v1574, 0.0
    %v1591 = vmax.f32 %v1575, 0.0
    %v1592 = vmax.f32 %v1576, 0.0
    %v1593 = vpack.c.bf16 %v1577, %v1577
    %v1594 = vpack.c.bf16 %v1578, %v1578
    %v1595 = vpack.c.bf16 %v1579, %v1579
    %v1596 = vpack.c.bf16 %v1580, %v1580
    %v1597 = vpack.c.bf16 %v1581, %v1581
    %v1598 = vpack.c.bf16 %v1582, %v1582
    %v1599 = vpack.c.bf16 %v1583, %v1583
    %v1600 = vpack.c.bf16 %v1584, %v1584
    %v1601 = vpack.c.bf16 %v1585, %v1585
    %v1602 = vpack.c.bf16 %v1586, %v1586
    %v1603 = vpack.c.bf16 %v1587, %v1587
    %v1604 = vpack.c.bf16 %v1588, %v1588
    %v1605 = vpack.c.bf16 %v1589, %v1589
    %v1606 = vpack.c.bf16 %v1590, %v1590
    %v1607 = vpack.c.bf16 %v1591, %v1591
    %v1608 = vpack.c.bf16 %v1592, %v1592
    %1609 = vst [vmem:[%s103] sm:$0xf] %v1593
    %1610 = vst [vmem:[%s103 + $0x4] sm:$0xf] %v1594
    %1611 = vst [vmem:[%s103 + $0x8] sm:$0xf] %v1595
    %1612 = vst [vmem:[%s103 + $0xc] sm:$0xf] %v1596
    %1613 = vst [vmem:[%s103 + $0x10] sm:$0xf] %v1597
    %1614 = vst [vmem:[%s103 + $0x14] sm:$0xf] %v1598
    %1615 = vst [vmem:[%s103 + $0x18] sm:$0xf] %v1599
    %1616 = vst [vmem:[%s103 + $0x1c] sm:$0xf] %v1600
    %1617 = vst [vmem:[%s103 + $0x20] sm:$0xf] %v1601
    %1618 = vst [vmem:[%s103 + $0x24] sm:$0xf] %v1602
    %1619 = vst [vmem:[%s103 + $0x28] sm:$0xf] %v1603
    %1620 = vst [vmem:[%s103 + $0x2c] sm:$0xf] %v1604
    %1621 = vst [vmem:[%s103 + $0x30] sm:$0xf] %v1605
    %1622 = vst [vmem:[%s103 + $0x34] sm:$0xf] %v1606
    %1623 = vst [vmem:[%s103 + $0x38] sm:$0xf] %v1607
    %1624 = vst [vmem:[%s103 + $0x3c] sm:$0xf] %v1608
    %v1625 = vld [vmem:[#allocation2] sm:$0xf]
    %v1626 = vld [vmem:[#allocation2 + $0x4] sm:$0xf]
    %v1627 = vld [vmem:[#allocation2 + $0x8] sm:$0xf]
    %v1628 = vld [vmem:[#allocation2 + $0xc] sm:$0xf]
    %v1629 = vld [vmem:[#allocation2 + $0x10] sm:$0xf]
    %v1630 = vld [vmem:[#allocation2 + $0x14] sm:$0xf]
    %v1631 = vld [vmem:[#allocation2 + $0x18] sm:$0xf]
    %v1632 = vld [vmem:[#allocation2 + $0x1c] sm:$0xf]
    %v1633 = vld [vmem:[#allocation2 + $0x20] sm:$0xf]
    %v1634 = vld [vmem:[#allocation2 + $0x24] sm:$0xf]
    %v1635 = vld [vmem:[#allocation2 + $0x28] sm:$0xf]
    %v1636 = vld [vmem:[#allocation2 + $0x2c] sm:$0xf]
    %v1637 = vld [vmem:[#allocation2 + $0x30] sm:$0xf]
    %v1638 = vld [vmem:[#allocation2 + $0x34] sm:$0xf]
    %v1639 = vld [vmem:[#allocation2 + $0x38] sm:$0xf]
    %v1640 = vld [vmem:[#allocation2 + $0x3c] sm:$0xf]
    %v1641 = vld [vmem:[#allocation2 + $0x40] sm:$0xf]
    %v1642 = vld [vmem:[#allocation2 + $0x44] sm:$0xf]
    %v1643 = vld [vmem:[#allocation2 + $0x48] sm:$0xf]
    %v1644 = vld [vmem:[#allocation2 + $0x4c] sm:$0xf]
    %v1665 = vunpack.c.l.b16 %v1625
    %v1666 = vunpack.c.l.b16 %v1626
    %v1667 = vunpack.c.l.b16 %v1627
    %v1668 = vunpack.c.l.b16 %v1628
    %v1669 = vunpack.c.l.b16 %v1629
    %v1670 = vunpack.c.l.b16 %v1630
    %v1671 = vunpack.c.l.b16 %v1631
    %v1672 = vunpack.c.l.b16 %v1632
    %v1673 = vunpack.c.l.b16 %v1633
    %v1674 = vunpack.c.l.b16 %v1634
    %v1675 = vunpack.c.l.b16 %v1635
    %v1676 = vunpack.c.l.b16 %v1636
    %v1677 = vunpack.c.l.b16 %v1637
    %v1678 = vunpack.c.l.b16 %v1638
    %v1679 = vunpack.c.l.b16 %v1639
    %v1680 = vunpack.c.l.b16 %v1640
    %v1681 = vunpack.c.l.b16 %v1641
    %v1682 = vunpack.c.l.b16 %v1642
    %v1683 = vunpack.c.l.b16 %v1643
    %v1684 = vunpack.c.l.b16 %v1644
    %s1685 = scalar_lea.vmem [#allocation6], 640
    %v1686 = vld [vmem:[%s1685] sm:$0xf]
    %v1687 = vld [vmem:[%s1685 + $0x4] sm:$0xf]
    %v1688 = vld [vmem:[%s1685 + $0x8] sm:$0xf]
    %v1689 = vld [vmem:[%s1685 + $0xc] sm:$0xf]
    %v1690 = vld [vmem:[%s1685 + $0x10] sm:$0xf]
    %v1691 = vld [vmem:[%s1685 + $0x14] sm:$0xf]
    %v1692 = vld [vmem:[%s1685 + $0x18] sm:$0xf]
    %v1693 = vld [vmem:[%s1685 + $0x1c] sm:$0xf]
    %v1694 = vld [vmem:[%s1685 + $0x20] sm:$0xf]
    %v1695 = vld [vmem:[%s1685 + $0x24] sm:$0xf]
    %v1696 = vld [vmem:[%s1685 + $0x28] sm:$0xf]
    %v1697 = vld [vmem:[%s1685 + $0x2c] sm:$0xf]
    %v1698 = vld [vmem:[%s1685 + $0x30] sm:$0xf]
    %v1699 = vld [vmem:[%s1685 + $0x34] sm:$0xf]
    %v1700 = vld [vmem:[%s1685 + $0x38] sm:$0xf]
    %v1701 = vld [vmem:[%s1685 + $0x3c] sm:$0xf]
    %v1702 = vld [vmem:[%s1685 + $0x40] sm:$0xf]
    %v1703 = vld [vmem:[%s1685 + $0x44] sm:$0xf]
    %v1704 = vld [vmem:[%s1685 + $0x48] sm:$0xf]
    %v1705 = vld [vmem:[%s1685 + $0x4c] sm:$0xf]
    %v1706 = vld [vmem:[%s1685 + $0x50] sm:$0xf]
    %v1707 = vld [vmem:[%s1685 + $0x54] sm:$0xf]
    %v1708 = vld [vmem:[%s1685 + $0x58] sm:$0xf]
    %v1709 = vld [vmem:[%s1685 + $0x5c] sm:$0xf]
    %v1710 = vld [vmem:[%s1685 + $0x60] sm:$0xf]
    %v1711 = vld [vmem:[%s1685 + $0x64] sm:$0xf]
    %v1712 = vld [vmem:[%s1685 + $0x68] sm:$0xf]
    %v1713 = vld [vmem:[%s1685 + $0x6c] sm:$0xf]
    %v1714 = vld [vmem:[%s1685 + $0x70] sm:$0xf]
    %v1715 = vld [vmem:[%s1685 + $0x74] sm:$0xf]
    %v1716 = vld [vmem:[%s1685 + $0x78] sm:$0xf]
    %v1717 = vld [vmem:[%s1685 + $0x7c] sm:$0xf]
    %v1718 = vld [vmem:[%s1685 + $0x80] sm:$0xf]
    %v1719 = vld [vmem:[%s1685 + $0x84] sm:$0xf]
    %v1720 = vld [vmem:[%s1685 + $0x88] sm:$0xf]
    %v1721 = vld [vmem:[%s1685 + $0x8c] sm:$0xf]
    %v1722 = vld [vmem:[%s1685 + $0x90] sm:$0xf]
    %v1723 = vld [vmem:[%s1685 + $0x94] sm:$0xf]
    %v1724 = vld [vmem:[%s1685 + $0x98] sm:$0xf]
    %v1725 = vld [vmem:[%s1685 + $0x9c] sm:$0xf]
    %v1726 = vld [vmem:[%s1685 + $0xa0] sm:$0xf]
    %v1727 = vld [vmem:[%s1685 + $0xa4] sm:$0xf]
    %v1728 = vld [vmem:[%s1685 + $0xa8] sm:$0xf]
    %v1729 = vld [vmem:[%s1685 + $0xac] sm:$0xf]
    %v1730 = vld [vmem:[%s1685 + $0xb0] sm:$0xf]
    %v1731 = vld [vmem:[%s1685 + $0xb4] sm:$0xf]
    %v1732 = vld [vmem:[%s1685 + $0xb8] sm:$0xf]
    %v1733 = vld [vmem:[%s1685 + $0xbc] sm:$0xf]
    %v1734 = vld [vmem:[%s1685 + $0xc0] sm:$0xf]
    %v1735 = vld [vmem:[%s1685 + $0xc4] sm:$0xf]
    %v1736 = vld [vmem:[%s1685 + $0xc8] sm:$0xf]
    %v1737 = vld [vmem:[%s1685 + $0xcc] sm:$0xf]
    %v1738 = vld [vmem:[%s1685 + $0xd0] sm:$0xf]
    %v1739 = vld [vmem:[%s1685 + $0xd4] sm:$0xf]
    %v1740 = vld [vmem:[%s1685 + $0xd8] sm:$0xf]
    %v1741 = vld [vmem:[%s1685 + $0xdc] sm:$0xf]
    %v1742 = vld [vmem:[%s1685 + $0xe0] sm:$0xf]
    %v1743 = vld [vmem:[%s1685 + $0xe4] sm:$0xf]
    %v1744 = vld [vmem:[%s1685 + $0xe8] sm:$0xf]
    %v1745 = vld [vmem:[%s1685 + $0xec] sm:$0xf]
    %v1746 = vld [vmem:[%s1685 + $0xf0] sm:$0xf]
    %v1747 = vld [vmem:[%s1685 + $0xf4] sm:$0xf]
    %v1748 = vld [vmem:[%s1685 + $0xf8] sm:$0xf]
    %v1749 = vld [vmem:[%s1685 + $0xfc] sm:$0xf]
    %v1750 = vld [vmem:[%s1685 + $0x100] sm:$0xf]
    %v1751 = vld [vmem:[%s1685 + $0x104] sm:$0xf]
    %v1752 = vld [vmem:[%s1685 + $0x108] sm:$0xf]
    %v1753 = vld [vmem:[%s1685 + $0x10c] sm:$0xf]
    %v1754 = vld [vmem:[%s1685 + $0x110] sm:$0xf]
    %v1755 = vld [vmem:[%s1685 + $0x114] sm:$0xf]
    %v1756 = vld [vmem:[%s1685 + $0x118] sm:$0xf]
    %v1757 = vld [vmem:[%s1685 + $0x11c] sm:$0xf]
    %v1758 = vld [vmem:[%s1685 + $0x120] sm:$0xf]
    %v1759 = vld [vmem:[%s1685 + $0x124] sm:$0xf]
    %v1760 = vld [vmem:[%s1685 + $0x128] sm:$0xf]
    %v1761 = vld [vmem:[%s1685 + $0x12c] sm:$0xf]
    %v1762 = vld [vmem:[%s1685 + $0x130] sm:$0xf]
    %v1763 = vld [vmem:[%s1685 + $0x134] sm:$0xf]
    %v1764 = vld [vmem:[%s1685 + $0x138] sm:$0xf]
    %v1765 = vld [vmem:[%s1685 + $0x13c] sm:$0xf]
    %v1766 = vpack.c.b16 %v1666, %v1665
    %v1767 = vpack.c.b16 %v1667, %v1666
    %v1768 = vpack.c.b16 %v1668, %v1667
    %v1769 = vpack.c.b16 %v1669, %v1668
    %v1770 = vpack.c.b16 %v1670, %v1669
    %v1771 = vpack.c.b16 %v1671, %v1670
    %v1772 = vpack.c.b16 %v1672, %v1671
    %v1773 = vpack.c.b16 %v1673, %v1672
    %v1774 = vpack.c.b16 %v1674, %v1673
    %v1775 = vpack.c.b16 %v1675, %v1674
    %v1776 = vpack.c.b16 %v1676, %v1675
    %v1777 = vpack.c.b16 %v1677, %v1676
    %v1778 = vpack.c.b16 %v1678, %v1677
    %v1779 = vpack.c.b16 %v1679, %v1678
    %v1780 = vpack.c.b16 %v1680, %v1679
    %v1781 = vpack.c.b16 %v1681, %v1680
    %v1782 = vpack.c.b16 %v1682, %v1681
    %v1783 = vpack.c.b16 %v1683, %v1682
    %v1784 = vpack.c.b16 %v1684, %v1683
    %v1884 = vunpack.c.l.b16 %v1686
    %v1885 = vunpack.c.l.b16 %v1687
    %v1886 = vunpack.c.l.b16 %v1688
    %v1887 = vunpack.c.l.b16 %v1689
    %v1888 = vunpack.c.l.b16 %v1690
    %v1889 = vunpack.c.l.b16 %v1691
    %v1890 = vunpack.c.l.b16 %v1692
    %v1891 = vunpack.c.l.b16 %v1693
    %v1892 = vunpack.c.l.b16 %v1694
    %v1893 = vunpack.c.l.b16 %v1695
    %v1894 = vunpack.c.l.b16 %v1696
    %v1895 = vunpack.c.l.b16 %v1697
    %v1896 = vunpack.c.l.b16 %v1698
    %v1897 = vunpack.c.l.b16 %v1699
    %v1898 = vunpack.c.l.b16 %v1700
    %v1899 = vunpack.c.l.b16 %v1701
    %v1900 = vunpack.c.l.b16 %v1702
    %v1901 = vunpack.c.l.b16 %v1703
    %v1902 = vunpack.c.l.b16 %v1704
    %v1903 = vunpack.c.l.b16 %v1705
    %v1904 = vunpack.c.l.b16 %v1706
    %v1905 = vunpack.c.l.b16 %v1707
    %v1906 = vunpack.c.l.b16 %v1708
    %v1907 = vunpack.c.l.b16 %v1709
    %v1908 = vunpack.c.l.b16 %v1710
    %v1909 = vunpack.c.l.b16 %v1711
    %v1910 = vunpack.c.l.b16 %v1712
    %v1911 = vunpack.c.l.b16 %v1713
    %v1912 = vunpack.c.l.b16 %v1714
    %v1913 = vunpack.c.l.b16 %v1715
    %v1914 = vunpack.c.l.b16 %v1716
    %v1915 = vunpack.c.l.b16 %v1717
    %v1916 = vunpack.c.l.b16 %v1718
    %v1917 = vunpack.c.l.b16 %v1719
    %v1918 = vunpack.c.l.b16 %v1720
    %v1919 = vunpack.c.l.b16 %v1721
    %v1920 = vunpack.c.l.b16 %v1722
    %v1921 = vunpack.c.l.b16 %v1723
    %v1922 = vunpack.c.l.b16 %v1724
    %v1923 = vunpack.c.l.b16 %v1725
    %v1924 = vunpack.c.l.b16 %v1726
    %v1925 = vunpack.c.l.b16 %v1727
    %v1926 = vunpack.c.l.b16 %v1728
    %v1927 = vunpack.c.l.b16 %v1729
    %v1928 = vunpack.c.l.b16 %v1730
    %v1929 = vunpack.c.l.b16 %v1731
    %v1930 = vunpack.c.l.b16 %v1732
    %v1931 = vunpack.c.l.b16 %v1733
    %v1932 = vunpack.c.l.b16 %v1734
    %v1933 = vunpack.c.l.b16 %v1735
    %v1934 = vunpack.c.l.b16 %v1736
    %v1935 = vunpack.c.l.b16 %v1737
    %v1936 = vunpack.c.l.b16 %v1738
    %v1937 = vunpack.c.l.b16 %v1739
    %v1938 = vunpack.c.l.b16 %v1740
    %v1939 = vunpack.c.l.b16 %v1741
    %v1940 = vunpack.c.l.b16 %v1742
    %v1941 = vunpack.c.l.b16 %v1743
    %v1942 = vunpack.c.l.b16 %v1744
    %v1943 = vunpack.c.l.b16 %v1745
    %v1944 = vunpack.c.l.b16 %v1746
    %v1945 = vunpack.c.l.b16 %v1747
    %v1946 = vunpack.c.l.b16 %v1748
    %v1947 = vunpack.c.l.b16 %v1749
    %v1948 = vunpack.c.l.b16 %v1750
    %v1949 = vunpack.c.l.b16 %v1751
    %v1950 = vunpack.c.l.b16 %v1752
    %v1951 = vunpack.c.l.b16 %v1753
    %v1952 = vunpack.c.l.b16 %v1754
    %v1953 = vunpack.c.l.b16 %v1755
    %v1954 = vunpack.c.l.b16 %v1756
    %v1955 = vunpack.c.l.b16 %v1757
    %v1956 = vunpack.c.l.b16 %v1758
    %v1957 = vunpack.c.l.b16 %v1759
    %v1958 = vunpack.c.l.b16 %v1760
    %v1959 = vunpack.c.l.b16 %v1761
    %v1960 = vunpack.c.l.b16 %v1762
    %v1961 = vunpack.c.l.b16 %v1763
    %v1962 = vunpack.c.l.b16 %v1764
    %v1963 = vunpack.c.l.b16 %v1765
    %v1964 = vpack.c.b16 %v1885, %v1884
    %v1965 = vpack.c.b16 %v1887, %v1886
    %v1966 = vpack.c.b16 %v1889, %v1888
    %v1967 = vpack.c.b16 %v1891, %v1890
    %v1968 = vpack.c.b16 %v1893, %v1892
    %v1969 = vpack.c.b16 %v1895, %v1894
    %v1970 = vpack.c.b16 %v1897, %v1896
    %v1971 = vpack.c.b16 %v1899, %v1898
    %v1972 = vpack.c.b16 %v1901, %v1900
    %v1973 = vpack.c.b16 %v1903, %v1902
    %v1974 = vpack.c.b16 %v1905, %v1904
    %v1975 = vpack.c.b16 %v1907, %v1906
    %v1976 = vpack.c.b16 %v1909, %v1908
    %v1977 = vpack.c.b16 %v1911, %v1910
    %v1978 = vpack.c.b16 %v1913, %v1912
    %v1979 = vpack.c.b16 %v1915, %v1914
    %v1980 = vpack.c.b16 %v1917, %v1916
    %v1981 = vpack.c.b16 %v1919, %v1918
    %v1982 = vpack.c.b16 %v1921, %v1920
    %v1983 = vpack.c.b16 %v1923, %v1922
    %v1984 = vpack.c.b16 %v1925, %v1924
    %v1985 = vpack.c.b16 %v1927, %v1926
    %v1986 = vpack.c.b16 %v1929, %v1928
    %v1987 = vpack.c.b16 %v1931, %v1930
    %v1988 = vpack.c.b16 %v1933, %v1932
    %v1989 = vpack.c.b16 %v1935, %v1934
    %v1990 = vpack.c.b16 %v1937, %v1936
    %v1991 = vpack.c.b16 %v1939, %v1938
    %v1992 = vpack.c.b16 %v1941, %v1940
    %v1993 = vpack.c.b16 %v1943, %v1942
    %v1994 = vpack.c.b16 %v1945, %v1944
    %v1995 = vpack.c.b16 %v1947, %v1946
    %v1996 = vpack.c.b16 %v1949, %v1948
    %v1997 = vpack.c.b16 %v1951, %v1950
    %v1998 = vpack.c.b16 %v1953, %v1952
    %v1999 = vpack.c.b16 %v1955, %v1954
    %v2000 = vpack.c.b16 %v1957, %v1956
    %v2001 = vpack.c.b16 %v1959, %v1958
    %v2002 = vpack.c.b16 %v1961, %v1960
    %v2003 = vpack.c.b16 %v1963, %v1962
    %2044 = vmatpush.bf16.msra.mxu0 %v1971
    %2045 = vmatpush.bf16.msra.mxu0 %v1970
    %2046 = vmatpush.bf16.msra.mxu0 %v1969
    %2047 = vmatpush.bf16.msra.mxu0 %v1968
    %2048 = vmatpush.bf16.msra.mxu0 %v1967
    %2049 = vmatpush.bf16.msra.mxu0 %v1966
    %2050 = vmatpush.bf16.msra.mxu0 %v1965
    %2051 = vmatpush.bf16.msra.mxu0 %v1964
    %2052 = vmatmul.bf16.gmra.mxu0 %v1766
    %v2053 = vpop.f32.mrf.mxu0
    %v2054 = vadd.f32 0.0, %v2053
    %v2055 = vpop.f32.mrf.mxu0
    %v2056 = vadd.f32 0.0, %v2055
    %2057 = vmatmul.bf16.gmra.mxu0 %v1768
    %v2058 = vpop.f32.mrf.mxu0
    %v2059 = vadd.f32 0.0, %v2058
    %v2060 = vpop.f32.mrf.mxu0
    %v2061 = vadd.f32 0.0, %v2060
    %2062 = vmatmul.bf16.gmra.mxu0 %v1770
    %v2063 = vpop.f32.mrf.mxu0
    %v2064 = vadd.f32 0.0, %v2063
    %v2065 = vpop.f32.mrf.mxu0
    %v2066 = vadd.f32 0.0, %v2065
    %2067 = vmatmul.bf16.gmra.mxu0 %v1772
    %v2068 = vpop.f32.mrf.mxu0
    %v2069 = vadd.f32 0.0, %v2068
    %v2070 = vpop.f32.mrf.mxu0
    %v2071 = vadd.f32 0.0, %v2070
    %2072 = vmatmul.bf16.gmra.mxu0 %v1774
    %v2073 = vpop.f32.mrf.mxu0
    %v2074 = vadd.f32 0.0, %v2073
    %v2075 = vpop.f32.mrf.mxu0
    %v2076 = vadd.f32 0.0, %v2075
    %2077 = vmatmul.bf16.gmra.mxu0 %v1776
    %v2078 = vpop.f32.mrf.mxu0
    %v2079 = vadd.f32 0.0, %v2078
    %v2080 = vpop.f32.mrf.mxu0
    %v2081 = vadd.f32 0.0, %v2080
    %2082 = vmatmul.bf16.gmra.mxu0 %v1778
    %v2083 = vpop.f32.mrf.mxu0
    %v2084 = vadd.f32 0.0, %v2083
    %v2085 = vpop.f32.mrf.mxu0
    %v2086 = vadd.f32 0.0, %v2085
    %2087 = vmatmul.bf16.gmra.mxu0 %v1780
    %v2088 = vpop.f32.mrf.mxu0
    %v2089 = vadd.f32 0.0, %v2088
    %v2090 = vpop.f32.mrf.mxu0
    %v2091 = vadd.f32 0.0, %v2090
    %2092 = vdwg.mxu0
    %2093 = vmatpush.bf16.msra.mxu0 %v1979
    %2094 = vmatpush.bf16.msra.mxu0 %v1978
    %2095 = vmatpush.bf16.msra.mxu0 %v1977
    %2096 = vmatpush.bf16.msra.mxu0 %v1976
    %2097 = vmatpush.bf16.msra.mxu0 %v1975
    %2098 = vmatpush.bf16.msra.mxu0 %v1974
    %2099 = vmatpush.bf16.msra.mxu0 %v1973
    %2100 = vmatpush.bf16.msra.mxu0 %v1972
    %2101 = vmatmul.bf16.gmra.mxu0 %v1767
    %v2102 = vpop.f32.mrf.mxu0
    %v2103 = vadd.f32 %v2054, %v2102
    %v2104 = vpop.f32.mrf.mxu0
    %v2105 = vadd.f32 %v2056, %v2104
    %2106 = vmatmul.bf16.gmra.mxu0 %v1769
    %v2107 = vpop.f32.mrf.mxu0
    %v2108 = vadd.f32 %v2059, %v2107
    %v2109 = vpop.f32.mrf.mxu0
    %v2110 = vadd.f32 %v2061, %v2109
    %2111 = vmatmul.bf16.gmra.mxu0 %v1771
    %v2112 = vpop.f32.mrf.mxu0
    %v2113 = vadd.f32 %v2064, %v2112
    %v2114 = vpop.f32.mrf.mxu0
    %v2115 = vadd.f32 %v2066, %v2114
    %2116 = vmatmul.bf16.gmra.mxu0 %v1773
    %v2117 = vpop.f32.mrf.mxu0
    %v2118 = vadd.f32 %v2069, %v2117
    %v2119 = vpop.f32.mrf.mxu0
    %v2120 = vadd.f32 %v2071, %v2119
    %2121 = vmatmul.bf16.gmra.mxu0 %v1775
    %v2122 = vpop.f32.mrf.mxu0
    %v2123 = vadd.f32 %v2074, %v2122
    %v2124 = vpop.f32.mrf.mxu0
    %v2125 = vadd.f32 %v2076, %v2124
    %2126 = vmatmul.bf16.gmra.mxu0 %v1777
    %v2127 = vpop.f32.mrf.mxu0
    %v2128 = vadd.f32 %v2079, %v2127
    %v2129 = vpop.f32.mrf.mxu0
    %v2130 = vadd.f32 %v2081, %v2129
    %2131 = vmatmul.bf16.gmra.mxu0 %v1779
    %v2132 = vpop.f32.mrf.mxu0
    %v2133 = vadd.f32 %v2084, %v2132
    %v2134 = vpop.f32.mrf.mxu0
    %v2135 = vadd.f32 %v2086, %v2134
    %2136 = vmatmul.bf16.gmra.mxu0 %v1781
    %v2137 = vpop.f32.mrf.mxu0
    %v2138 = vadd.f32 %v2089, %v2137
    %v2139 = vpop.f32.mrf.mxu0
    %v2140 = vadd.f32 %v2091, %v2139
    %2141 = vdwg.mxu0
    %2142 = vmatpush.bf16.msra.mxu0 %v1987
    %2143 = vmatpush.bf16.msra.mxu0 %v1986
    %2144 = vmatpush.bf16.msra.mxu0 %v1985
    %2145 = vmatpush.bf16.msra.mxu0 %v1984
    %2146 = vmatpush.bf16.msra.mxu0 %v1983
    %2147 = vmatpush.bf16.msra.mxu0 %v1982
    %2148 = vmatpush.bf16.msra.mxu0 %v1981
    %2149 = vmatpush.bf16.msra.mxu0 %v1980
    %2150 = vmatmul.bf16.gmra.mxu0 %v1768
    %v2151 = vpop.f32.mrf.mxu0
    %v2152 = vadd.f32 %v2103, %v2151
    %v2153 = vpop.f32.mrf.mxu0
    %v2154 = vadd.f32 %v2105, %v2153
    %2155 = vmatmul.bf16.gmra.mxu0 %v1770
    %v2156 = vpop.f32.mrf.mxu0
    %v2157 = vadd.f32 %v2108, %v2156
    %v2158 = vpop.f32.mrf.mxu0
    %v2159 = vadd.f32 %v2110, %v2158
    %2160 = vmatmul.bf16.gmra.mxu0 %v1772
    %v2161 = vpop.f32.mrf.mxu0
    %v2162 = vadd.f32 %v2113, %v2161
    %v2163 = vpop.f32.mrf.mxu0
    %v2164 = vadd.f32 %v2115, %v2163
    %2165 = vmatmul.bf16.gmra.mxu0 %v1774
    %v2166 = vpop.f32.mrf.mxu0
    %v2167 = vadd.f32 %v2118, %v2166
    %v2168 = vpop.f32.mrf.mxu0
    %v2169 = vadd.f32 %v2120, %v2168
    %2170 = vmatmul.bf16.gmra.mxu0 %v1776
    %v2171 = vpop.f32.mrf.mxu0
    %v2172 = vadd.f32 %v2123, %v2171
    %v2173 = vpop.f32.mrf.mxu0
    %v2174 = vadd.f32 %v2125, %v2173
    %2175 = vmatmul.bf16.gmra.mxu0 %v1778
    %v2176 = vpop.f32.mrf.mxu0
    %v2177 = vadd.f32 %v2128, %v2176
    %v2178 = vpop.f32.mrf.mxu0
    %v2179 = vadd.f32 %v2130, %v2178
    %2180 = vmatmul.bf16.gmra.mxu0 %v1780
    %v2181 = vpop.f32.mrf.mxu0
    %v2182 = vadd.f32 %v2133, %v2181
    %v2183 = vpop.f32.mrf.mxu0
    %v2184 = vadd.f32 %v2135, %v2183
    %2185 = vmatmul.bf16.gmra.mxu0 %v1782
    %v2186 = vpop.f32.mrf.mxu0
    %v2187 = vadd.f32 %v2138, %v2186
    %v2188 = vpop.f32.mrf.mxu0
    %v2189 = vadd.f32 %v2140, %v2188
    %2190 = vdwg.mxu0
    %2191 = vmatpush.bf16.msra.mxu0 %v1995
    %2192 = vmatpush.bf16.msra.mxu0 %v1994
    %2193 = vmatpush.bf16.msra.mxu0 %v1993
    %2194 = vmatpush.bf16.msra.mxu0 %v1992
    %2195 = vmatpush.bf16.msra.mxu0 %v1991
    %2196 = vmatpush.bf16.msra.mxu0 %v1990
    %2197 = vmatpush.bf16.msra.mxu0 %v1989
    %2198 = vmatpush.bf16.msra.mxu0 %v1988
    %2199 = vmatmul.bf16.gmra.mxu0 %v1769
    %v2200 = vpop.f32.mrf.mxu0
    %v2201 = vadd.f32 %v2152, %v2200
    %v2202 = vpop.f32.mrf.mxu0
    %v2203 = vadd.f32 %v2154, %v2202
    %2204 = vmatmul.bf16.gmra.mxu0 %v1771
    %v2205 = vpop.f32.mrf.mxu0
    %v2206 = vadd.f32 %v2157, %v2205
    %v2207 = vpop.f32.mrf.mxu0
    %v2208 = vadd.f32 %v2159, %v2207
    %2209 = vmatmul.bf16.gmra.mxu0 %v1773
    %v2210 = vpop.f32.mrf.mxu0
    %v2211 = vadd.f32 %v2162, %v2210
    %v2212 = vpop.f32.mrf.mxu0
    %v2213 = vadd.f32 %v2164, %v2212
    %2214 = vmatmul.bf16.gmra.mxu0 %v1775
    %v2215 = vpop.f32.mrf.mxu0
    %v2216 = vadd.f32 %v2167, %v2215
    %v2217 = vpop.f32.mrf.mxu0
    %v2218 = vadd.f32 %v2169, %v2217
    %2219 = vmatmul.bf16.gmra.mxu0 %v1777
    %v2220 = vpop.f32.mrf.mxu0
    %v2221 = vadd.f32 %v2172, %v2220
    %v2222 = vpop.f32.mrf.mxu0
    %v2223 = vadd.f32 %v2174, %v2222
    %2224 = vmatmul.bf16.gmra.mxu0 %v1779
    %v2225 = vpop.f32.mrf.mxu0
    %v2226 = vadd.f32 %v2177, %v2225
    %v2227 = vpop.f32.mrf.mxu0
    %v2228 = vadd.f32 %v2179, %v2227
    %2229 = vmatmul.bf16.gmra.mxu0 %v1781
    %v2230 = vpop.f32.mrf.mxu0
    %v2231 = vadd.f32 %v2182, %v2230
    %v2232 = vpop.f32.mrf.mxu0
    %v2233 = vadd.f32 %v2184, %v2232
    %2234 = vmatmul.bf16.gmra.mxu0 %v1783
    %v2235 = vpop.f32.mrf.mxu0
    %v2236 = vadd.f32 %v2187, %v2235
    %v2237 = vpop.f32.mrf.mxu0
    %v2238 = vadd.f32 %v2189, %v2237
    %2239 = vdwg.mxu0
    %2240 = vmatpush.bf16.msra.mxu0 %v2003
    %2241 = vmatpush.bf16.msra.mxu0 %v2002
    %2242 = vmatpush.bf16.msra.mxu0 %v2001
    %2243 = vmatpush.bf16.msra.mxu0 %v2000
    %2244 = vmatpush.bf16.msra.mxu0 %v1999
    %2245 = vmatpush.bf16.msra.mxu0 %v1998
    %2246 = vmatpush.bf16.msra.mxu0 %v1997
    %2247 = vmatpush.bf16.msra.mxu0 %v1996
    %2248 = vmatmul.bf16.gmra.mxu0 %v1770
    %v2249 = vpop.f32.mrf.mxu0
    %v2250 = vadd.f32 %v2201, %v2249
    %v2251 = vpop.f32.mrf.mxu0
    %v2252 = vadd.f32 %v2203, %v2251
    %2253 = vmatmul.bf16.gmra.mxu0 %v1772
    %v2254 = vpop.f32.mrf.mxu0
    %v2255 = vadd.f32 %v2206, %v2254
    %v2256 = vpop.f32.mrf.mxu0
    %v2257 = vadd.f32 %v2208, %v2256
    %2258 = vmatmul.bf16.gmra.mxu0 %v1774
    %v2259 = vpop.f32.mrf.mxu0
    %v2260 = vadd.f32 %v2211, %v2259
    %v2261 = vpop.f32.mrf.mxu0
    %v2262 = vadd.f32 %v2213, %v2261
    %2263 = vmatmul.bf16.gmra.mxu0 %v1776
    %v2264 = vpop.f32.mrf.mxu0
    %v2265 = vadd.f32 %v2216, %v2264
    %v2266 = vpop.f32.mrf.mxu0
    %v2267 = vadd.f32 %v2218, %v2266
    %2268 = vmatmul.bf16.gmra.mxu0 %v1778
    %v2269 = vpop.f32.mrf.mxu0
    %v2270 = vadd.f32 %v2221, %v2269
    %v2271 = vpop.f32.mrf.mxu0
    %v2272 = vadd.f32 %v2223, %v2271
    %2273 = vmatmul.bf16.gmra.mxu0 %v1780
    %v2274 = vpop.f32.mrf.mxu0
    %v2275 = vadd.f32 %v2226, %v2274
    %v2276 = vpop.f32.mrf.mxu0
    %v2277 = vadd.f32 %v2228, %v2276
    %2278 = vmatmul.bf16.gmra.mxu0 %v1782
    %v2279 = vpop.f32.mrf.mxu0
    %v2280 = vadd.f32 %v2231, %v2279
    %v2281 = vpop.f32.mrf.mxu0
    %v2282 = vadd.f32 %v2233, %v2281
    %2283 = vmatmul.bf16.gmra.mxu0 %v1784
    %v2284 = vpop.f32.mrf.mxu0
    %v2285 = vadd.f32 %v2236, %v2284
    %v2286 = vpop.f32.mrf.mxu0
    %v2287 = vadd.f32 %v2238, %v2286
    %2288 = vdwg.mxu0
    %s2289 = scalar_lea.vmem [#allocation8], 2
    %v2290 = vld [vmem:[%s2289] sm:$0x1]
    %v2292 = vperm.slane %v2290, 0
    %v2294 = vmul.f32 %v2250, %v2292
    %v2295 = vmul.f32 %v2252, %v2292
    %v2296 = vmul.f32 %v2255, %v2292
    %v2297 = vmul.f32 %v2257, %v2292
    %v2298 = vmul.f32 %v2260, %v2292
    %v2299 = vmul.f32 %v2262, %v2292
    %v2300 = vmul.f32 %v2265, %v2292
    %v2301 = vmul.f32 %v2267, %v2292
    %v2302 = vmul.f32 %v2270, %v2292
    %v2303 = vmul.f32 %v2272, %v2292
    %v2304 = vmul.f32 %v2275, %v2292
    %v2305 = vmul.f32 %v2277, %v2292
    %v2306 = vmul.f32 %v2280, %v2292
    %v2307 = vmul.f32 %v2282, %v2292
    %v2308 = vmul.f32 %v2285, %v2292
    %v2309 = vmul.f32 %v2287, %v2292
    %s2310 = scalar_lea.vmem [#allocation9], 2
    %v2311 = vld [vmem:[%s2310] sm:$0x1]
    %v2313 = vperm.slane %v2311, 0
    %v2315 = vadd.f32 %v2294, %v2313
    %v2316 = vadd.f32 %v2295, %v2313
    %v2317 = vadd.f32 %v2296, %v2313
    %v2318 = vadd.f32 %v2297, %v2313
    %v2319 = vadd.f32 %v2298, %v2313
    %v2320 = vadd.f32 %v2299, %v2313
    %v2321 = vadd.f32 %v2300, %v2313
    %v2322 = vadd.f32 %v2301, %v2313
    %v2323 = vadd.f32 %v2302, %v2313
    %v2324 = vadd.f32 %v2303, %v2313
    %v2325 = vadd.f32 %v2304, %v2313
    %v2326 = vadd.f32 %v2305, %v2313
    %v2327 = vadd.f32 %v2306, %v2313
    %v2328 = vadd.f32 %v2307, %v2313
    %v2329 = vadd.f32 %v2308, %v2313
    %v2330 = vadd.f32 %v2309, %v2313
    %v2331 = vmax.f32 %v2315, 0.0
    %v2332 = vmax.f32 %v2316, 0.0
    %v2333 = vmax.f32 %v2317, 0.0
    %v2334 = vmax.f32 %v2318, 0.0
    %v2335 = vmax.f32 %v2319, 0.0
    %v2336 = vmax.f32 %v2320, 0.0
    %v2337 = vmax.f32 %v2321, 0.0
    %v2338 = vmax.f32 %v2322, 0.0
    %v2339 = vmax.f32 %v2323, 0.0
    %v2340 = vmax.f32 %v2324, 0.0
    %v2341 = vmax.f32 %v2325, 0.0
    %v2342 = vmax.f32 %v2326, 0.0
    %v2343 = vmax.f32 %v2327, 0.0
    %v2344 = vmax.f32 %v2328, 0.0
    %v2345 = vmax.f32 %v2329, 0.0
    %v2346 = vmax.f32 %v2330, 0.0
    %v2347 = vpack.c.bf16 %v2331, %v2331
    %v2348 = vpack.c.bf16 %v2332, %v2332
    %v2349 = vpack.c.bf16 %v2333, %v2333
    %v2350 = vpack.c.bf16 %v2334, %v2334
    %v2351 = vpack.c.bf16 %v2335, %v2335
    %v2352 = vpack.c.bf16 %v2336, %v2336
    %v2353 = vpack.c.bf16 %v2337, %v2337
    %v2354 = vpack.c.bf16 %v2338, %v2338
    %v2355 = vpack.c.bf16 %v2339, %v2339
    %v2356 = vpack.c.bf16 %v2340, %v2340
    %v2357 = vpack.c.bf16 %v2341, %v2341
    %v2358 = vpack.c.bf16 %v2342, %v2342
    %v2359 = vpack.c.bf16 %v2343, %v2343
    %v2360 = vpack.c.bf16 %v2344, %v2344
    %v2361 = vpack.c.bf16 %v2345, %v2345
    %v2362 = vpack.c.bf16 %v2346, %v2346
    %2363 = vst [vmem:[#allocation11] sm:$0xf] %v2347
    %2364 = vst [vmem:[#allocation11 + $0x4] sm:$0xf] %v2348
    %2365 = vst [vmem:[#allocation11 + $0x8] sm:$0xf] %v2349
    %2366 = vst [vmem:[#allocation11 + $0xc] sm:$0xf] %v2350
    %2367 = vst [vmem:[#allocation11 + $0x10] sm:$0xf] %v2351
    %2368 = vst [vmem:[#allocation11 + $0x14] sm:$0xf] %v2352
    %2369 = vst [vmem:[#allocation11 + $0x18] sm:$0xf] %v2353
    %2370 = vst [vmem:[#allocation11 + $0x1c] sm:$0xf] %v2354
    %2371 = vst [vmem:[#allocation11 + $0x20] sm:$0xf] %v2355
    %2372 = vst [vmem:[#allocation11 + $0x24] sm:$0xf] %v2356
    %2373 = vst [vmem:[#allocation11 + $0x28] sm:$0xf] %v2357
    %2374 = vst [vmem:[#allocation11 + $0x2c] sm:$0xf] %v2358
    %2375 = vst [vmem:[#allocation11 + $0x30] sm:$0xf] %v2359
    %2376 = vst [vmem:[#allocation11 + $0x34] sm:$0xf] %v2360
    %2377 = vst [vmem:[#allocation11 + $0x38] sm:$0xf] %v2361
    %2378 = vst [vmem:[#allocation11 + $0x3c] sm:$0xf] %v2362
    // Predicated region
    $region34: #{tpu_custom_call.1} parent=1 // pred_check
      _
    $region35: #{tpu_custom_call.1} parent=1 // pred_check_branch
      %2380 = sbr.rel (0) target = $region37
    $region36: #{tpu_custom_call.1} parent=1 // pred_region
      %2382 = vsyncadd [#allocation5], 0
      %s2383 = sshll.u32 [#allocation11], 4
      %s2384 = int_to_ptr.vmem [resolvable:$true] %s2383
      %s2385 = sshll.u32 %s4, 4
      %s2386 = int_to_ptr.hbm [resolvable:$true] %s2385
      %2391 = dma.vmem_to_hbm [thread:$0]  %s2384, 1024, %s2386, [#allocation5], 64, 64, 4
    $region37: #{tpu_custom_call.1} parent=1 // pred_fallthru
      _
    // Predicated region
    $region38: #{tpu_custom_call.1} parent=1 // pred_check
      _
    $region39: #{tpu_custom_call.1} parent=1 // pred_check_branch
      %2393 = sbr.rel (0) target = $region41
    $region40: #{tpu_custom_call.1} parent=1 // pred_region
      %2395 = dma.done [#allocation5], 1024
    $region41: #{tpu_custom_call.1} parent=1 // pred_fallthru
      _
    %2396 = vsyncpa [#allocation4], 1
    %2397 = vsyncpa [#allocation7], 1
    %2398 = vsyncpa [#allocation10], 1
    %2399 = vsyncpa [#allocation5], 1

</llo_original>
